<compile_context>
chip_gen: v5e
topology: v5e:2x2
jax: 0.10.0
libtpu: 0.0.40
codegen_flags: <defaults>
</compile_context>

<pallas_src>
import jax
import jax.numpy as jnp
import numpy as np
from jax.experimental import pallas as pl
from jax.experimental.pallas import tpu as pltpu


def _sgn_kernel(x_ref, wre_ref, wim_ref, mfwd_ref, minv_re_ref, minv_im_ref, o_ref):
    # x_ref    : (1, N*N, Cb)  input slab, spatial flattened, channels last (lanes)
    # wre/wim  : (F, Cb)       complex spectral gate (F = N*(N//2+1)), channels last
    # mfwd     : (2F, N*N)     [Re ; Im] rows of the ortho rfft2 matrix
    # minv_re  : (N*N, F)      ortho irfft2 matrix acting on Re(Y) (alpha fold folded in)
    # minv_im  : (N*N, F)      ortho irfft2 matrix acting on Im(Y)
    # o_ref    : (1, N*N, Cb)
    f = wre_ref.shape[0]

    xf = x_ref[0]                                                        # (N*N, Cb)

    # forward rfft2 (ortho): one MXU matmul, K = N*N, channels in the free dim
    s = jnp.dot(mfwd_ref[...], xf, preferred_element_type=jnp.float32)  # (2F, Cb)
    sre = s[:f]
    sim = s[f:]

    # spectral gating: elementwise complex multiply (channels in lanes)
    wre = wre_ref[...]
    wim = wim_ref[...]
    tre = sre * wre - sim * wim
    tim = sre * wim + sim * wre

    # inverse irfft2 (ortho, s=(N,N)): two MXU matmuls, K = F
    y = (jnp.dot(minv_re_ref[...], tre, preferred_element_type=jnp.float32)
         + jnp.dot(minv_im_ref[...], tim, preferred_element_type=jnp.float32))

    o_ref[0] = y.astype(o_ref.dtype)


def _dft_tables(n):
    """Ortho-scaled real rfft2 / irfft2 matrices (float64 trig, cast to f32)."""
    nf = n // 2 + 1
    idx = np.arange(n)

    # forward: X[u,v] = (1/n) * sum_{h,w} x[h,w] * exp(-2i*pi*(u*h + v*w)/n)
    u = idx[:, None, None, None]
    v = idx[None, :nf, None, None]
    h = idx[None, None, :, None]
    w = idx[None, None, None, :]
    ang_f = (2.0 * np.pi / n) * ((u * h + v * w) % n)                    # (n,nf,n,n)
    mre = np.cos(ang_f) / n
    mim = -np.sin(ang_f) / n
    mfwd = np.concatenate(
        [mre.reshape(n * nf, n * n), mim.reshape(n * nf, n * n)], axis=0
    ).astype(np.float32)                                                 # (2F, n*n)

    # inverse (pocketfft/torch c2r fold, imag of DC/Nyquist columns ignored):
    #   y[a,b] = (1/n) * sum_{u,v} alpha_v * [Re(Y)[u,v]*cos(2pi(u*a+v*b)/n)
    #                                         - Im(Y)[u,v]*sin(2pi(u*a+v*b)/n)]
    a = idx[:, None, None, None]
    b = idx[None, :, None, None]
    uu = idx[None, None, :, None]
    vv = idx[None, None, None, :nf]
    ang_i = (2.0 * np.pi / n) * ((uu * a + vv * b) % n)                  # (n,n,n,nf)
    alpha = np.full((nf,), 2.0)
    alpha[0] = 1.0
    if n % 2 == 0:
        alpha[nf - 1] = 1.0
    minv_re = ((alpha * np.cos(ang_i)) / n).reshape(n * n, n * nf).astype(np.float32)
    minv_im = ((-alpha * np.sin(ang_i)) / n).reshape(n * n, n * nf).astype(np.float32)
    return mfwd, minv_re, minv_im


def make_spectral_gating(complex_weight, *, c_block=128):
    """Build a jitted forward for SpectralGatingNetwork.

    complex_weight: (h, h//2+1, dim, 2) float32 (same layout as the nn.Parameter).
    Returned fn maps x (B, h, h, dim) -> (B, h, h, dim) float32.
    DFT tables and reshaped gate weights are built once, closed over as constants.
    """
    n, nf, c, two = complex_weight.shape
    assert two == 2 and nf == n // 2 + 1, "weight must be (h, h//2+1, dim, 2)"
    cb = min(c, c_block)
    assert c % cb == 0

    mfwd_np, minv_re_np, minv_im_np = _dft_tables(n)
    mfwd = jnp.asarray(mfwd_np)
    minv_re = jnp.asarray(minv_re_np)
    minv_im = jnp.asarray(minv_im_np)

    w32 = jnp.asarray(complex_weight, dtype=jnp.float32)
    wre = w32[..., 0].reshape(n * nf, c)      # channels already last -> free reshape
    wim = w32[..., 1].reshape(n * nf, c)

    f2 = 2 * n * nf

    @jax.jit
    def forward(x):
        bsz = x.shape[0]
        assert x.shape[1:] == (n, n, c), "square spatial input (h == w) expected"
        # contiguity-preserving reshape only (no HBM transpose pass)
        xf = x.astype(jnp.float32).reshape(bsz, n * n, c)

        out = pl.pallas_call(
            _sgn_kernel,
            out_shape=jax.ShapeDtypeStruct((bsz, n * n, c), jnp.float32),
            grid=(bsz, c // cb),
            in_specs=[
                pl.BlockSpec((1, n * n, cb), lambda b, ci: (b, 0, ci)),    # x slab
                pl.BlockSpec((n * nf, cb), lambda b, ci: (0, ci)),         # gate re
                pl.BlockSpec((n * nf, cb), lambda b, ci: (0, ci)),         # gate im
                # constant index maps -> DFT matrices stay VMEM-resident
                pl.BlockSpec((f2, n * n), lambda b, ci: (0, 0)),           # mfwd
                pl.BlockSpec((n * n, n * nf), lambda b, ci: (0, 0)),       # minv_re
                pl.BlockSpec((n * n, n * nf), lambda b, ci: (0, 0)),       # minv_im
            ],
            out_specs=pl.BlockSpec((1, n * n, cb), lambda b, ci: (b, 0, ci)),
            compiler_params=pltpu.CompilerParams(
                dimension_semantics=("parallel", "parallel")),
        )(xf, wre, wim, mfwd, minv_re, minv_im)

        return out.reshape(bsz, n, n, c)      # free reshape back to (B, h, h, dim)

    return forward


if __name__ == "__main__":
    key = jax.random.PRNGKey(0)
    kx, kw = jax.random.split(key)

    # SpectralGatingNetwork(dim=32, h=16, w=16//2+1): input (B, h, h, dim)
    B, H, C = 2, 16, 32
    NF = H // 2 + 1
    x = jax.random.normal(kx, (B, H, H, C), dtype=jnp.float32)
    cw = 0.02 * jax.random.normal(kw, (H, NF, C, 2), dtype=jnp.float32)

    sgn = make_spectral_gating(cw)
    y = sgn(x)
    jax.block_until_ready(y)
    assert y.shape == (B, H, H, C)

    # independent ground truth: host numpy FFT in float64 (pocketfft, same
    # rfft2/irfft2 conventions as torch.fft)
    xn = np.asarray(x, dtype=np.float64)
    wn = np.asarray(cw, dtype=np.float64)
    wc = wn[..., 0] + 1j * wn[..., 1]
    xf_ref = np.fft.rfft2(xn, axes=(1, 2), norm='ortho')
    y_ref = np.fft.irfft2(xf_ref * wc[None], s=(H, H), axes=(1, 2), norm='ortho')

    assert np.allclose(np.asarray(y, dtype=np.float64), y_ref, atol=2e-3, rtol=2e-3)

    print("KERNEL_OK")
</pallas_src>

<mosaic_0001>
module attributes {stable_mosaic.version = 11 : i64} {
  func.func @_sgn_kernel(%arg0: i32, %arg1: i32, %arg2: memref<1x256x32xf32, #tpu.memory_space<vmem>>, %arg3: memref<144x32xf32, #tpu.memory_space<vmem>>, %arg4: memref<144x32xf32, #tpu.memory_space<vmem>>, %arg5: memref<288x256xf32, #tpu.memory_space<vmem>>, %arg6: memref<256x144xf32, #tpu.memory_space<vmem>>, %arg7: memref<256x144xf32, #tpu.memory_space<vmem>>, %arg8: memref<1x256x32xf32, #tpu.memory_space<vmem>>) attributes {dimension_semantics = [#tpu.dimension_semantics<parallel>, #tpu.dimension_semantics<parallel>], iteration_bounds = array<i64: 2, 1>, scalar_prefetch = 0 : i64, scratch_operands = 0 : i64, tpu.core_type = #tpu.core_type<tc>, window_params = [{transform_indices = @transform_0, window_bounds = array<i64: 1, 256, 32>}, {transform_indices = @transform_1, window_bounds = array<i64: 144, 32>}, {transform_indices = @transform_2, window_bounds = array<i64: 144, 32>}, {pipeline_mode = #tpu.pipeline_mode<synchronous>, transform_indices = @transform_3, window_bounds = array<i64: 288, 256>}, {pipeline_mode = #tpu.pipeline_mode<synchronous>, transform_indices = @transform_4, window_bounds = array<i64: 256, 144>}, {pipeline_mode = #tpu.pipeline_mode<synchronous>, transform_indices = @transform_5, window_bounds = array<i64: 256, 144>}, {transform_indices = @transform_6, window_bounds = array<i64: 1, 256, 32>}]} {
    %c0 = arith.constant 0 : index
    %c0_0 = arith.constant 0 : index
    %c0_1 = arith.constant 0 : index
    %0 = vector.load %arg2[%c0, %c0_0, %c0_1] : memref<1x256x32xf32, #tpu.memory_space<vmem>>, vector<1x256x32xf32>
    %1 = vector.shape_cast %0 : vector<1x256x32xf32> to vector<256x32xf32>
    %c0_2 = arith.constant 0 : index
    %c0_3 = arith.constant 0 : index
    %2 = vector.load %arg5[%c0_2, %c0_3] : memref<288x256xf32, #tpu.memory_space<vmem>>, vector<288x256xf32>
    %cst = arith.constant dense<0.000000e+00> : vector<288x32xf32>
    %3 = tpu.matmul %2, %1, %cst {dimension_numbers = #tpu.dot_dimension_numbers<[1], [0], [0], [1], [0, 0, 1, 1], [], []>} : vector<288x256xf32>, vector<256x32xf32>, vector<288x32xf32> -> vector<288x32xf32>
    %4 = vector.extract_strided_slice %3 {offsets = [0, 0], sizes = [144, 32], strides = [1, 1]} : vector<288x32xf32> to vector<144x32xf32>
    %5 = vector.extract_strided_slice %3 {offsets = [144, 0], sizes = [144, 32], strides = [1, 1]} : vector<288x32xf32> to vector<144x32xf32>
    %c0_4 = arith.constant 0 : index
    %c0_5 = arith.constant 0 : index
    %6 = vector.load %arg3[%c0_4, %c0_5] : memref<144x32xf32, #tpu.memory_space<vmem>>, vector<144x32xf32>
    %c0_6 = arith.constant 0 : index
    %c0_7 = arith.constant 0 : index
    %7 = vector.load %arg4[%c0_6, %c0_7] : memref<144x32xf32, #tpu.memory_space<vmem>>, vector<144x32xf32>
    %8 = arith.mulf %4, %6 : vector<144x32xf32>
    %9 = arith.mulf %5, %7 : vector<144x32xf32>
    %10 = arith.subf %8, %9 : vector<144x32xf32>
    %11 = arith.mulf %4, %7 : vector<144x32xf32>
    %12 = arith.mulf %5, %6 : vector<144x32xf32>
    %13 = arith.addf %11, %12 : vector<144x32xf32>
    %c0_8 = arith.constant 0 : index
    %c0_9 = arith.constant 0 : index
    %14 = vector.load %arg6[%c0_8, %c0_9] : memref<256x144xf32, #tpu.memory_space<vmem>>, vector<256x144xf32>
    %cst_10 = arith.constant dense<0.000000e+00> : vector<256x32xf32>
    %15 = tpu.matmul %14, %10, %cst_10 {dimension_numbers = #tpu.dot_dimension_numbers<[1], [0], [0], [1], [0, 0, 1, 1], [], []>} : vector<256x144xf32>, vector<144x32xf32>, vector<256x32xf32> -> vector<256x32xf32>
    %c0_11 = arith.constant 0 : index
    %c0_12 = arith.constant 0 : index
    %16 = vector.load %arg7[%c0_11, %c0_12] : memref<256x144xf32, #tpu.memory_space<vmem>>, vector<256x144xf32>
    %cst_13 = arith.constant dense<0.000000e+00> : vector<256x32xf32>
    %17 = tpu.matmul %16, %13, %cst_13 {dimension_numbers = #tpu.dot_dimension_numbers<[1], [0], [0], [1], [0, 0, 1, 1], [], []>} : vector<256x144xf32>, vector<144x32xf32>, vector<256x32xf32> -> vector<256x32xf32>
    %18 = arith.addf %15, %17 : vector<256x32xf32>
    %c0_14 = arith.constant 0 : index
    %c0_15 = arith.constant 0 : index
    %c0_16 = arith.constant 0 : index
    %19 = vector.load %arg8[%c0_14, %c0_15, %c0_16] : memref<1x256x32xf32, #tpu.memory_space<vmem>>, vector<1x256x32xf32>
    %20 = vector.shape_cast %19 : vector<1x256x32xf32> to vector<256x32xf32>
    %21 = vector.shape_cast %18 : vector<256x32xf32> to vector<1x256x32xf32>
    tpu.vector_store %arg8[%c0_14, %c0_15, %c0_16], %21 {strides = array<i32>} : memref<1x256x32xf32, #tpu.memory_space<vmem>>, vector<1x256x32xf32>,
    return
  }
  func.func @transform_0(%arg0: i32, %arg1: i32) -> (i32, i32, i32) {
    %c0_i32 = arith.constant 0 : i32
    %c0_i32_0 = arith.constant 0 : i32
    return %arg0, %c0_i32, %arg1 : i32, i32, i32
  }
  func.func @transform_1(%arg0: i32, %arg1: i32) -> (i32, i32) {
    %c0_i32 = arith.constant 0 : i32
    %c0_i32_0 = arith.constant 0 : i32
    return %c0_i32, %arg1 : i32, i32
  }
  func.func @transform_2(%arg0: i32, %arg1: i32) -> (i32, i32) {
    %c0_i32 = arith.constant 0 : i32
    %c0_i32_0 = arith.constant 0 : i32
    return %c0_i32, %arg1 : i32, i32
  }
  func.func @transform_3(%arg0: i32, %arg1: i32) -> (i32, i32) {
    %c0_i32 = arith.constant 0 : i32
    %c0_i32_0 = arith.constant 0 : i32
    %c0_i32_1 = arith.constant 0 : i32
    return %c0_i32, %c0_i32_0 : i32, i32
  }
  func.func @transform_4(%arg0: i32, %arg1: i32) -> (i32, i32) {
    %c0_i32 = arith.constant 0 : i32
    %c0_i32_0 = arith.constant 0 : i32
    %c0_i32_1 = arith.constant 0 : i32
    return %c0_i32, %c0_i32_0 : i32, i32
  }
  func.func @transform_5(%arg0: i32, %arg1: i32) -> (i32, i32) {
    %c0_i32 = arith.constant 0 : i32
    %c0_i32_0 = arith.constant 0 : i32
    %c0_i32_1 = arith.constant 0 : i32
    return %c0_i32, %c0_i32_0 : i32, i32
  }
  func.func @transform_6(%arg0: i32, %arg1: i32) -> (i32, i32, i32) {
    %c0_i32 = arith.constant 0 : i32
    %c0_i32_0 = arith.constant 0 : i32
    return %arg0, %c0_i32, %arg1 : i32, i32, i32
  }
}

</mosaic_0001>

<llo_original>
// kernel: forward.1
$region0: #{forward.1}
  #allocation0 [shape = 'u32[]', space=smem, size = 0x4, offset = 0x4, fixed_abs, tag = 'smem constant byte address 0x4 - core index']
  #allocation1 [shape = 'u32[72,128]{1,0:T(1,128)}', space=vmem, size = 0x9000, scoped, tag = 'internal scratch']
  %s0 = inlined_call_operand.hbm [shape: f32[2,256,32], index: 0, kind: input, shape index: {}]
  %s1 = inlined_call_operand.hbm [shape: f32[144,32], index: 1, kind: input, shape index: {}]
  %s2 = inlined_call_operand.hbm [shape: f32[144,32], index: 2, kind: input, shape index: {}]
  %s3 = inlined_call_operand.hbm [shape: f32[288,256], index: 3, kind: input, shape index: {}]
  %s4 = inlined_call_operand.hbm [shape: f32[256,144], index: 4, kind: input, shape index: {}]
  %s5 = inlined_call_operand.hbm [shape: f32[256,144], index: 5, kind: input, shape index: {}]
  %s6 = inlined_call_operand.hbm [shape: f32[2,256,32], index: 6, kind: output, shape index: {}]
  %s7 = sld [smem:[#allocation0]]
  $region81: #{forward.1} parent=0
    _
  %s9 = ssub.s32 1, %s7
  %s10 = scalar_select 0, %s9, %s7
  $region1: #{forward.1} parent=0
    #allocation2 [shape = 'u8[262144]{0}', space=vmem, size = 0x40000, scoped, tag = 'input window, operand 0']
    #allocation3 [shape = 's32[2]{0}', space=sflag, size = 0x8, scoped, tag = 'scoped memory for forward.1']
    #allocation4 [shape = 's32[2]{0}', space=sflag, size = 0x8, scoped, tag = 'scoped memory for forward.1']
    #allocation5 [shape = 'u8[73728]{0}', space=vmem, size = 0x12000, scoped, tag = 'input window, operand 1, single buffered']
    #allocation6 [shape = 's32[1]{0}', space=sflag, size = 0x4, scoped, tag = 'scoped memory for forward.1']
    #allocation7 [shape = 'u8[73728]{0}', space=vmem, size = 0x12000, scoped, tag = 'input window, operand 2, single buffered']
    #allocation8 [shape = 'u8[294912]{0}', space=vmem, size = 0x48000, scoped, tag = 'input window, operand 3, single buffered']
    #allocation9 [shape = 's32[1]{0}', space=sflag, size = 0x4, scoped, tag = 'scoped memory for forward.1']
    #allocation10 [shape = 'u8[262144]{0}', space=vmem, size = 0x40000, scoped, tag = 'input window, operand 4, single buffered']
    #allocation11 [shape = 'u8[262144]{0}', space=vmem, size = 0x40000, scoped, tag = 'input window, operand 5, single buffered']
    #allocation12 [shape = 's32[1]{0}', space=sflag, size = 0x4, scoped, tag = 'scoped memory for forward.1']
    #allocation13 [shape = 'u8[262144]{0}', space=vmem, size = 0x40000, scoped, tag = 'output window, operand 0']
    %11 = vsyncpa [#allocation3], 0
    %s12 = scalar_lea.sflag [#allocation3], 1
    %13 = vsyncpa %s12, 0
    %14 = vsyncpa [#allocation6], 0
    %15 = vsyncpa [#allocation9], 0
    %16 = vsyncpa [#allocation12], 0
    %17 = vsyncpa [#allocation4], 0
    %s18 = scalar_lea.sflag [#allocation4], 1
    %19 = vsyncpa %s18, 0
    loop: start=0, step=1, limit=4
    $region2: #{forward.1} parent=1 // loop_pre_header
      _
    $region3: #{forward.1} parent=1 // loop_header
      %s21 = sphi 0, %s25
      %p22 = scmp.ge.s32.totalorder %s21, 4
      %s28 = sphi 0, %s40
      %s29 = sphi 0, %s36
      %s30 = sphi 0, %s28
      %s31 = sphi 0, %s29
      %s32 = sphi 0, %s30
      %s33 = sphi 0, %s31
      %s45 = sphi 0, %s47
      %s48 = sphi 0, %s45
      %s49 = sphi 0, %s48
      %s65 = sphi 0, %s49
      %s71 = sphi 0, %s73
      %s74 = sphi 0, %s71
      %s75 = sphi 0, %s74
      %s91 = sphi 0, %s75
      %s97 = sphi 0, %s99
      %s100 = sphi 0, %s97
      %s101 = sphi 0, %s100
      %s117 = sphi 0, %s101
      %s121 = sphi 0, %s121
      %s123 = sphi 0, %s121
      %s124 = sphi 0, %s123
      %s138 = sphi 0, %s124
      %s142 = sphi 0, %s142
      %s144 = sphi 0, %s142
      %s145 = sphi 0, %s144
      %s159 = sphi 0, %s145
      %s163 = sphi 0, %s163
      %s165 = sphi 0, %s163
      %s166 = sphi 0, %s165
      %s180 = sphi 0, %s166
      %s188 = sphi 0, %s190
      %s191 = sphi 0, %s188
      %s192 = sphi 0, %s191
      %s208 = sphi 0, %s192
    $region4: #{forward.1} parent=1 // loop_header_branch
      %24 = sbr.rel (%p22) target = $region8
    $region5: #{forward.1} parent=1 // loop_body
      %s26 = ssub.s32 %s21, 1
      %s27 = ssub.s32 %s21, 2
      %s34 = sadd.s32 1, %s29
      %p35 = scmp.ge.s32.totalorder %s34, 1
      %s36 = scalar_select %p35, 0, %s34
      %s37 = sadd.s32 1, %s28
      %s38 = scalar_select %p35, %s37, %s28
      %p39 = scmp.ge.s32.totalorder %s38, 2
      %s40 = scalar_select %p39, 0, %s38
      %s41 = ssub.s32 %s28, %s40
      %s42 = ssub.s32 %s29, %s36
      %s43 = sor.u32 %s41, %s42
      %p44 = scmp.eq.s32.totalorder %s43, 0
      %s46 = sadd.s32 %s45, 1
      %s47 = scalar_select %p44, %s45, %s46
      %p50 = pneg %p44
      %p51 = scmp.eq.s32.totalorder %s21, 1
      %p52 = por %p50, %p51
      %p53 = scmp.ne.s32.totalorder %s45, %s48
      %p54 = scmp.eq.s32.totalorder %s21, 0
      %p55 = por %p53, %p54
      %p56 = scmp.ne.s32.totalorder %s45, %s48
      %p57 = scmp.eq.s32.totalorder %s26, 1
      %p58 = por %p56, %p57
      %p59 = scmp.ne.s32.totalorder %s48, %s49
      %p60 = scmp.eq.s32.totalorder %s26, 0
      %p61 = por %p59, %p60
      %p62 = scmp.ne.s32.totalorder %s48, %s49
      %p63 = scmp.eq.s32.totalorder %s27, 1
      %p64 = por %p62, %p63
      %p66 = scmp.ne.s32.totalorder %s49, %s65
      %p67 = scmp.eq.s32.totalorder %s27, 0
      %p68 = por %p66, %p67
      %s69 = ssub.s32 %s29, %s36
      %p70 = scmp.eq.s32.totalorder %s69, 0
      %s72 = sadd.s32 %s71, 1
      %s73 = scalar_select %p70, %s71, %s72
      %p76 = pneg %p70
      %p77 = scmp.eq.s32.totalorder %s21, 1
      %p78 = por %p76, %p77
      %p79 = scmp.ne.s32.totalorder %s71, %s74
      %p80 = scmp.eq.s32.totalorder %s21, 0
      %p81 = por %p79, %p80
      %p82 = scmp.ne.s32.totalorder %s71, %s74
      %p83 = scmp.eq.s32.totalorder %s26, 1
      %p84 = por %p82, %p83
      %p85 = scmp.ne.s32.totalorder %s74, %s75
      %p86 = scmp.eq.s32.totalorder %s26, 0
      %p87 = por %p85, %p86
      %p88 = scmp.ne.s32.totalorder %s74, %s75
      %p89 = scmp.eq.s32.totalorder %s27, 1
      %p90 = por %p88, %p89
      %p92 = scmp.ne.s32.totalorder %s75, %s91
      %p93 = scmp.eq.s32.totalorder %s27, 0
      %p94 = por %p92, %p93
      %s95 = ssub.s32 %s29, %s36
      %p96 = scmp.eq.s32.totalorder %s95, 0
      %s98 = sadd.s32 %s97, 1
      %s99 = scalar_select %p96, %s97, %s98
      %p102 = pneg %p96
      %p103 = scmp.eq.s32.totalorder %s21, 1
      %p104 = por %p102, %p103
      %p105 = scmp.ne.s32.totalorder %s97, %s100
      %p106 = scmp.eq.s32.totalorder %s21, 0
      %p107 = por %p105, %p106
      %p108 = scmp.ne.s32.totalorder %s97, %s100
      %p109 = scmp.eq.s32.totalorder %s26, 1
      %p110 = por %p108, %p109
      %p111 = scmp.ne.s32.totalorder %s100, %s101
      %p112 = scmp.eq.s32.totalorder %s26, 0
      %p113 = por %p111, %p112
      %p114 = scmp.ne.s32.totalorder %s100, %s101
      %p115 = scmp.eq.s32.totalorder %s27, 1
      %p116 = por %p114, %p115
      %p118 = scmp.ne.s32.totalorder %s101, %s117
      %p119 = scmp.eq.s32.totalorder %s27, 0
      %p120 = por %p118, %p119
      %s122 = sadd.s32 %s121, 1
      %p125 = scmp.eq.s32.totalorder %s21, 1
      %p126 = scmp.ne.s32.totalorder %s121, %s123
      %p127 = scmp.eq.s32.totalorder %s21, 0
      %p128 = por %p126, %p127
      %p129 = scmp.ne.s32.totalorder %s121, %s123
      %p130 = scmp.eq.s32.totalorder %s26, 1
      %p131 = por %p129, %p130
      %p132 = scmp.ne.s32.totalorder %s123, %s124
      %p133 = scmp.eq.s32.totalorder %s26, 0
      %p134 = por %p132, %p133
      %p135 = scmp.ne.s32.totalorder %s123, %s124
      %p136 = scmp.eq.s32.totalorder %s27, 1
      %p137 = por %p135, %p136
      %p139 = scmp.ne.s32.totalorder %s124, %s138
      %p140 = scmp.eq.s32.totalorder %s27, 0
      %p141 = por %p139, %p140
      %s143 = sadd.s32 %s142, 1
      %p146 = scmp.eq.s32.totalorder %s21, 1
      %p147 = scmp.ne.s32.totalorder %s142, %s144
      %p148 = scmp.eq.s32.totalorder %s21, 0
      %p149 = por %p147, %p148
      %p150 = scmp.ne.s32.totalorder %s142, %s144
      %p151 = scmp.eq.s32.totalorder %s26, 1
      %p152 = por %p150, %p151
      %p153 = scmp.ne.s32.totalorder %s144, %s145
      %p154 = scmp.eq.s32.totalorder %s26, 0
      %p155 = por %p153, %p154
      %p156 = scmp.ne.s32.totalorder %s144, %s145
      %p157 = scmp.eq.s32.totalorder %s27, 1
      %p158 = por %p156, %p157
      %p160 = scmp.ne.s32.totalorder %s145, %s159
      %p161 = scmp.eq.s32.totalorder %s27, 0
      %p162 = por %p160, %p161
      %s164 = sadd.s32 %s163, 1
      %p167 = scmp.eq.s32.totalorder %s21, 1
      %p168 = scmp.ne.s32.totalorder %s163, %s165
      %p169 = scmp.eq.s32.totalorder %s21, 0
      %p170 = por %p168, %p169
      %p171 = scmp.ne.s32.totalorder %s163, %s165
      %p172 = scmp.eq.s32.totalorder %s26, 1
      %p173 = por %p171, %p172
      %p174 = scmp.ne.s32.totalorder %s165, %s166
      %p175 = scmp.eq.s32.totalorder %s26, 0
      %p176 = por %p174, %p175
      %p177 = scmp.ne.s32.totalorder %s165, %s166
      %p178 = scmp.eq.s32.totalorder %s27, 1
      %p179 = por %p177, %p178
      %p181 = scmp.ne.s32.totalorder %s166, %s180
      %p182 = scmp.eq.s32.totalorder %s27, 0
      %p183 = por %p181, %p182
      %s184 = ssub.s32 %s28, %s40
      %s185 = ssub.s32 %s29, %s36
      %s186 = sor.u32 %s184, %s185
      %p187 = scmp.eq.s32.totalorder %s186, 0
      %s189 = sadd.s32 %s188, 1
      %s190 = scalar_select %p187, %s188, %s189
      %p193 = pneg %p187
      %p194 = scmp.eq.s32.totalorder %s21, 1
      %p195 = por %p193, %p194
      %p196 = scmp.ne.s32.totalorder %s188, %s191
      %p197 = scmp.eq.s32.totalorder %s21, 0
      %p198 = por %p196, %p197
      %p199 = scmp.ne.s32.totalorder %s188, %s191
      %p200 = scmp.eq.s32.totalorder %s26, 1
      %p201 = por %p199, %p200
      %p202 = scmp.ne.s32.totalorder %s191, %s192
      %p203 = scmp.eq.s32.totalorder %s26, 0
      %p204 = por %p202, %p203
      %p205 = scmp.ne.s32.totalorder %s191, %s192
      %p206 = scmp.eq.s32.totalorder %s27, 1
      %p207 = por %p205, %p206
      %p209 = scmp.ne.s32.totalorder %s192, %s208
      %p210 = scmp.eq.s32.totalorder %s27, 0
      %p211 = por %p209, %p210
      %p212 = scmp.le.s32.totalorder 1, %s21
      %p213 = scmp.lt.s32.totalorder %s21, 3
      %p214 = pnand %p212, %p213
      %p215 = pneg %p214
      // Predicated region
      $region9: #{forward.1} parent=5 // pred_check
        _
      $region10: #{forward.1} parent=5 // pred_check_branch
        %217 = sbr.rel (%p214) target = $region12
      $region11: #{forward.1} parent=5 // pred_region
        %s218 = ssub.s32 %s21, 1
        // Predicated region
        $region13: #{forward.1} parent=11 // pred_check
          %p219 = pneg %p87
        $region14: #{forward.1} parent=11 // pred_check_branch
          %221 = sbr.rel (%p219) target = $region16
        $region15: #{forward.1} parent=11 // pred_region
          %223 = vsyncadd [#allocation6], 0
          %s224 = smul.addr %s31, 8
          %s225 = scalar_lea.hbm %s1, %s224
          %s226 = sshll.u32 %s225, 4
          %s227 = int_to_ptr.hbm [resolvable:$true] %s226
          %s228 = sshll.u32 [#allocation5], 4
          %s229 = int_to_ptr.vmem [resolvable:$true] %s228
          %234 = dma.hbm_to_vmem [thread:$0]  %s227, 2304, %s229, [#allocation6], 128, 128, 8
        $region16: #{forward.1} parent=11 // pred_fallthru
          _
        // Predicated region
        $region17: #{forward.1} parent=11 // pred_check
          %p235 = pneg %p113
        $region18: #{forward.1} parent=11 // pred_check_branch
          %237 = sbr.rel (%p235) target = $region20
        $region19: #{forward.1} parent=11 // pred_region
          %239 = vsyncadd [#allocation6], 0
          %s240 = smul.addr %s31, 8
          %s241 = scalar_lea.hbm %s2, %s240
          %s242 = sshll.u32 %s241, 4
          %s243 = int_to_ptr.hbm [resolvable:$true] %s242
          %s244 = sshll.u32 [#allocation7], 4
          %s245 = int_to_ptr.vmem [resolvable:$true] %s244
          %250 = dma.hbm_to_vmem [thread:$0]  %s243, 2304, %s245, [#allocation6], 128, 128, 8
        $region20: #{forward.1} parent=11 // pred_fallthru
          _
        // Predicated region
        $region21: #{forward.1} parent=11 // pred_check
          %p251 = pneg %p134
        $region22: #{forward.1} parent=11 // pred_check_branch
          %253 = sbr.rel (%p251) target = $region24
        $region23: #{forward.1} parent=11 // pred_region
          %255 = vsyncadd [#allocation9], 0
          %s256 = sshll.u32 %s3, 4
          %s257 = int_to_ptr.hbm [resolvable:$true] %s256
          %s258 = sshll.u32 [#allocation8], 4
          %s259 = int_to_ptr.vmem [resolvable:$true] %s258
          %264 = dma.hbm_to_vmem [thread:$0]  %s257, 9216, %s259, [#allocation9], 256, 256, 16
        $region24: #{forward.1} parent=11 // pred_fallthru
          _
        // Predicated region
        $region25: #{forward.1} parent=11 // pred_check
          %p265 = pneg %p155
        $region26: #{forward.1} parent=11 // pred_check_branch
          %267 = sbr.rel (%p265) target = $region28
        $region27: #{forward.1} parent=11 // pred_region
          %269 = vsyncadd [#allocation9], 0
          %s270 = sshll.u32 %s4, 4
          %s271 = int_to_ptr.hbm [resolvable:$true] %s270
          %s272 = sshll.u32 [#allocation10], 4
          %s273 = int_to_ptr.vmem [resolvable:$true] %s272
          %278 = dma.hbm_to_vmem [thread:$0]  %s271, 8192, %s273, [#allocation9], 256, 256, 16
        $region28: #{forward.1} parent=11 // pred_fallthru
          _
        // Predicated region
        $region29: #{forward.1} parent=11 // pred_check
          %p279 = pneg %p176
        $region30: #{forward.1} parent=11 // pred_check_branch
          %281 = sbr.rel (%p279) target = $region32
        $region31: #{forward.1} parent=11 // pred_region
          %283 = vsyncadd [#allocation12], 0
          %s284 = sshll.u32 %s5, 4
          %s285 = int_to_ptr.hbm [resolvable:$true] %s284
          %s286 = sshll.u32 [#allocation11], 4
          %s287 = int_to_ptr.vmem [resolvable:$true] %s286
          %292 = dma.hbm_to_vmem [thread:$0]  %s285, 8192, %s287, [#allocation12], 256, 256, 16
        $region32: #{forward.1} parent=11 // pred_fallthru
          _
      $region12: #{forward.1} parent=5 // pred_fallthru
        _
      %p293 = scmp.lt.s32.totalorder %s21, 2
      // Predicated region
      $region33: #{forward.1} parent=5 // pred_check
        %p294 = pneg %p293
      $region34: #{forward.1} parent=5 // pred_check_branch
        %296 = sbr.rel (%p294) target = $region36
      $region35: #{forward.1} parent=5 // pred_region
        // Predicated region
        $region37: #{forward.1} parent=35 // pred_check
          %p297 = pneg %p55
        $region38: #{forward.1} parent=35 // pred_check_branch
          %299 = sbr.rel (%p297) target = $region40
        $region39: #{forward.1} parent=35 // pred_region
          %s300 = sand.u32 %s45, 1
          %s301 = scalar_lea.sflag [#allocation3], %s300
          %s302 = sand.u32 %s45, 1
          %s303 = smul.addr %s302, 256
          %s304 = scalar_lea.vmem [#allocation2], %s303
          %306 = vsyncadd %s301, 0
          %s307 = smul.addr %s28, 32
          %s308 = sadd.s32 %s29, %s307
          %s309 = smul.addr %s308, 8
          %s310 = scalar_lea.hbm %s0, %s309
          %s311 = sshll.u32 %s310, 4
          %s312 = int_to_ptr.hbm [resolvable:$true] %s311
          %s313 = sshll.u32 %s304, 4
          %s314 = int_to_ptr.vmem [resolvable:$true] %s313
          %319 = dma.hbm_to_vmem [thread:$0]  %s312, 4096, %s314, %s301, 128, 128, 8
        $region40: #{forward.1} parent=35 // pred_fallthru
          _
      $region36: #{forward.1} parent=5 // pred_fallthru
        _
      %p320 = scmp.le.s32.totalorder 1, %s21
      %p321 = scmp.lt.s32.totalorder %s21, 3
      %p322 = pnand %p320, %p321
      %p323 = pneg %p322
      // Predicated region
      $region41: #{forward.1} parent=5 // pred_check
        _
      $region42: #{forward.1} parent=5 // pred_check_branch
        %325 = sbr.rel (%p322) target = $region44
      $region43: #{forward.1} parent=5 // pred_region
        %s326 = ssub.s32 %s21, 1
        %s327 = sand.u32 %s48, 1
        %s328 = scalar_lea.sflag [#allocation3], %s327
        %s329 = sand.u32 %s48, 1
        %s330 = smul.addr %s329, 256
        %s331 = scalar_lea.vmem [#allocation2], %s330
        // Predicated region
        $region45: #{forward.1} parent=43 // pred_check
          %p332 = pneg %p61
        $region46: #{forward.1} parent=43 // pred_check_branch
          %334 = sbr.rel (%p332) target = $region48
        $region47: #{forward.1} parent=43 // pred_region
          %336 = dma.done %s328, 4096
        $region48: #{forward.1} parent=43 // pred_fallthru
          _
        // Predicated region
        $region49: #{forward.1} parent=43 // pred_check
          %p337 = pneg %p87
        $region50: #{forward.1} parent=43 // pred_check_branch
          %339 = sbr.rel (%p337) target = $region52
        $region51: #{forward.1} parent=43 // pred_region
          %341 = dma.done [#allocation6], 2304
        $region52: #{forward.1} parent=43 // pred_fallthru
          _
        // Predicated region
        $region53: #{forward.1} parent=43 // pred_check
          %p342 = pneg %p113
        $region54: #{forward.1} parent=43 // pred_check_branch
          %344 = sbr.rel (%p342) target = $region56
        $region55: #{forward.1} parent=43 // pred_region
          %346 = dma.done [#allocation6], 2304
        $region56: #{forward.1} parent=43 // pred_fallthru
          _
        // Predicated region
        $region57: #{forward.1} parent=43 // pred_check
          %p347 = pneg %p134
        $region58: #{forward.1} parent=43 // pred_check_branch
          %349 = sbr.rel (%p347) target = $region60
        $region59: #{forward.1} parent=43 // pred_region
          %351 = dma.done [#allocation9], 9216
        $region60: #{forward.1} parent=43 // pred_fallthru
          _
        // Predicated region
        $region61: #{forward.1} parent=43 // pred_check
          %p352 = pneg %p155
        $region62: #{forward.1} parent=43 // pred_check_branch
          %354 = sbr.rel (%p352) target = $region64
        $region63: #{forward.1} parent=43 // pred_region
          %356 = dma.done [#allocation9], 8192
        $region64: #{forward.1} parent=43 // pred_fallthru
          _
        // Predicated region
        $region65: #{forward.1} parent=43 // pred_check
          %p357 = pneg %p176
        $region66: #{forward.1} parent=43 // pred_check_branch
          %359 = sbr.rel (%p357) target = $region68
        $region67: #{forward.1} parent=43 // pred_region
          %361 = dma.done [#allocation12], 8192
        $region68: #{forward.1} parent=43 // pred_fallthru
          _
        %s362 = sand.u32 %s48, 1
        %s363 = scalar_lea.sflag [#allocation3], %s362
        %s364 = sand.u32 %s48, 1
        %s365 = smul.addr %s364, 256
        %s366 = scalar_lea.vmem [#allocation2], %s365
        %p367 = pneg %p61
        %p368 = pneg %p58
        %p369 = pneg %p87
        %p370 = pneg %p84
        %p371 = pneg %p113
        %p372 = pneg %p110
        %p373 = pneg %p134
        %p374 = pneg %p131
        %p375 = pneg %p155
        %p376 = pneg %p152
        %p377 = pneg %p176
        %p378 = pneg %p173
        %p379 = pneg %p204
        %p380 = pneg %p201
        %s381 = sand.u32 %s191, 1
        %s382 = scalar_lea.sflag [#allocation4], %s381
        %s383 = sand.u32 %s191, 1
        %s384 = smul.addr %s383, 256
        %s385 = scalar_lea.vmem [#allocation13], %s384
        %v386 = vld [vmem:[%s331] sm:$0xff]
        %v387 = vld [vmem:[%s331 + $0x8] sm:$0xff]
        %v388 = vld [vmem:[%s331 + $0x10] sm:$0xff]
        %v389 = vld [vmem:[%s331 + $0x18] sm:$0xff]
        %v390 = vld [vmem:[%s331 + $0x20] sm:$0xff]
        %v391 = vld [vmem:[%s331 + $0x28] sm:$0xff]
        %v392 = vld [vmem:[%s331 + $0x30] sm:$0xff]
        %v393 = vld [vmem:[%s331 + $0x38] sm:$0xff]
        %v394 = vld [vmem:[%s331 + $0x40] sm:$0xff]
        %v395 = vld [vmem:[%s331 + $0x48] sm:$0xff]
        %v396 = vld [vmem:[%s331 + $0x50] sm:$0xff]
        %v397 = vld [vmem:[%s331 + $0x58] sm:$0xff]
        %v398 = vld [vmem:[%s331 + $0x60] sm:$0xff]
        %v399 = vld [vmem:[%s331 + $0x68] sm:$0xff]
        %v400 = vld [vmem:[%s331 + $0x70] sm:$0xff]
        %v401 = vld [vmem:[%s331 + $0x78] sm:$0xff]
        %v402 = vld [vmem:[%s331 + $0x80] sm:$0xff]
        %v403 = vld [vmem:[%s331 + $0x88] sm:$0xff]
        %v404 = vld [vmem:[%s331 + $0x90] sm:$0xff]
        %v405 = vld [vmem:[%s331 + $0x98] sm:$0xff]
        %v406 = vld [vmem:[%s331 + $0xa0] sm:$0xff]
        %v407 = vld [vmem:[%s331 + $0xa8] sm:$0xff]
        %v408 = vld [vmem:[%s331 + $0xb0] sm:$0xff]
        %v409 = vld [vmem:[%s331 + $0xb8] sm:$0xff]
        %v410 = vld [vmem:[%s331 + $0xc0] sm:$0xff]
        %v411 = vld [vmem:[%s331 + $0xc8] sm:$0xff]
        %v412 = vld [vmem:[%s331 + $0xd0] sm:$0xff]
        %v413 = vld [vmem:[%s331 + $0xd8] sm:$0xff]
        %v414 = vld [vmem:[%s331 + $0xe0] sm:$0xff]
        %v415 = vld [vmem:[%s331 + $0xe8] sm:$0xff]
        %v416 = vld [vmem:[%s331 + $0xf0] sm:$0xff]
        %v417 = vld [vmem:[%s331 + $0xf8] sm:$0xff]
        %v418 = vld [vmem:[#allocation8] sm:$0xff]
        %v419 = vld [vmem:[#allocation8 + $0x8] sm:$0xff]
        %v420 = vld [vmem:[#allocation8 + $0x10] sm:$0xff]
        %v421 = vld [vmem:[#allocation8 + $0x18] sm:$0xff]
        %v422 = vld [vmem:[#allocation8 + $0x20] sm:$0xff]
        %v423 = vld [vmem:[#allocation8 + $0x28] sm:$0xff]
        %v424 = vld [vmem:[#allocation8 + $0x30] sm:$0xff]
        %v425 = vld [vmem:[#allocation8 + $0x38] sm:$0xff]
        %v426 = vld [vmem:[#allocation8 + $0x40] sm:$0xff]
        %v427 = vld [vmem:[#allocation8 + $0x48] sm:$0xff]
        %v428 = vld [vmem:[#allocation8 + $0x50] sm:$0xff]
        %v429 = vld [vmem:[#allocation8 + $0x58] sm:$0xff]
        %v430 = vld [vmem:[#allocation8 + $0x60] sm:$0xff]
        %v431 = vld [vmem:[#allocation8 + $0x68] sm:$0xff]
        %v432 = vld [vmem:[#allocation8 + $0x70] sm:$0xff]
        %v433 = vld [vmem:[#allocation8 + $0x78] sm:$0xff]
        %v434 = vld [vmem:[#allocation8 + $0x80] sm:$0xff]
        %v435 = vld [vmem:[#allocation8 + $0x88] sm:$0xff]
        %v436 = vld [vmem:[#allocation8 + $0x90] sm:$0xff]
        %v437 = vld [vmem:[#allocation8 + $0x98] sm:$0xff]
        %v438 = vld [vmem:[#allocation8 + $0xa0] sm:$0xff]
        %v439 = vld [vmem:[#allocation8 + $0xa8] sm:$0xff]
        %v440 = vld [vmem:[#allocation8 + $0xb0] sm:$0xff]
        %v441 = vld [vmem:[#allocation8 + $0xb8] sm:$0xff]
        %v442 = vld [vmem:[#allocation8 + $0xc0] sm:$0xff]
        %v443 = vld [vmem:[#allocation8 + $0xc8] sm:$0xff]
        %v444 = vld [vmem:[#allocation8 + $0xd0] sm:$0xff]
        %v445 = vld [vmem:[#allocation8 + $0xd8] sm:$0xff]
        %v446 = vld [vmem:[#allocation8 + $0xe0] sm:$0xff]
        %v447 = vld [vmem:[#allocation8 + $0xe8] sm:$0xff]
        %v448 = vld [vmem:[#allocation8 + $0xf0] sm:$0xff]
        %v449 = vld [vmem:[#allocation8 + $0xf8] sm:$0xff]
        %v450 = vld [vmem:[#allocation8 + $0x100] sm:$0xff]
        %v451 = vld [vmem:[#allocation8 + $0x108] sm:$0xff]
        %v452 = vld [vmem:[#allocation8 + $0x110] sm:$0xff]
        %v453 = vld [vmem:[#allocation8 + $0x118] sm:$0xff]
        %v454 = vld [vmem:[#allocation8 + $0x120] sm:$0xff]
        %v455 = vld [vmem:[#allocation8 + $0x128] sm:$0xff]
        %v456 = vld [vmem:[#allocation8 + $0x130] sm:$0xff]
        %v457 = vld [vmem:[#allocation8 + $0x138] sm:$0xff]
        %v458 = vld [vmem:[#allocation8 + $0x140] sm:$0xff]
        %v459 = vld [vmem:[#allocation8 + $0x148] sm:$0xff]
        %v460 = vld [vmem:[#allocation8 + $0x150] sm:$0xff]
        %v461 = vld [vmem:[#allocation8 + $0x158] sm:$0xff]
        %v462 = vld [vmem:[#allocation8 + $0x160] sm:$0xff]
        %v463 = vld [vmem:[#allocation8 + $0x168] sm:$0xff]
        %v464 = vld [vmem:[#allocation8 + $0x170] sm:$0xff]
        %v465 = vld [vmem:[#allocation8 + $0x178] sm:$0xff]
        %v466 = vld [vmem:[#allocation8 + $0x180] sm:$0xff]
        %v467 = vld [vmem:[#allocation8 + $0x188] sm:$0xff]
        %v468 = vld [vmem:[#allocation8 + $0x190] sm:$0xff]
        %v469 = vld [vmem:[#allocation8 + $0x198] sm:$0xff]
        %v470 = vld [vmem:[#allocation8 + $0x1a0] sm:$0xff]
        %v471 = vld [vmem:[#allocation8 + $0x1a8] sm:$0xff]
        %v472 = vld [vmem:[#allocation8 + $0x1b0] sm:$0xff]
        %v473 = vld [vmem:[#allocation8 + $0x1b8] sm:$0xff]
        %v474 = vld [vmem:[#allocation8 + $0x1c0] sm:$0xff]
        %v475 = vld [vmem:[#allocation8 + $0x1c8] sm:$0xff]
        %v476 = vld [vmem:[#allocation8 + $0x1d0] sm:$0xff]
        %v477 = vld [vmem:[#allocation8 + $0x1d8] sm:$0xff]
        %v478 = vld [vmem:[#allocation8 + $0x1e0] sm:$0xff]
        %v479 = vld [vmem:[#allocation8 + $0x1e8] sm:$0xff]
        %v480 = vld [vmem:[#allocation8 + $0x1f0] sm:$0xff]
        %v481 = vld [vmem:[#allocation8 + $0x1f8] sm:$0xff]
        %v482 = vld [vmem:[#allocation8 + $0x200] sm:$0xff]
        %v483 = vld [vmem:[#allocation8 + $0x208] sm:$0xff]
        %v484 = vld [vmem:[#allocation8 + $0x210] sm:$0xff]
        %v485 = vld [vmem:[#allocation8 + $0x218] sm:$0xff]
        %v486 = vld [vmem:[#allocation8 + $0x220] sm:$0xff]
        %v487 = vld [vmem:[#allocation8 + $0x228] sm:$0xff]
        %v488 = vld [vmem:[#allocation8 + $0x230] sm:$0xff]
        %v489 = vld [vmem:[#allocation8 + $0x238] sm:$0xff]
        %490 = vmatpush.msra.mxu0 %v401
        %491 = vmatpush.msra.mxu0 %v400
        %492 = vmatpush.msra.mxu0 %v399
        %493 = vmatpush.msra.mxu0 %v398
        %494 = vmatpush.msra.mxu0 %v397
        %495 = vmatpush.msra.mxu0 %v396
        %496 = vmatpush.msra.mxu0 %v395
        %497 = vmatpush.msra.mxu0 %v394
        %498 = vmatpush.msra.mxu0 %v393
        %499 = vmatpush.msra.mxu0 %v392
        %500 = vmatpush.msra.mxu0 %v391
        %501 = vmatpush.msra.mxu0 %v390
        %502 = vmatpush.msra.mxu0 %v389
        %503 = vmatpush.msra.mxu0 %v388
        %504 = vmatpush.msra.mxu0 %v387
        %505 = vmatpush.msra.mxu0 %v386
        %506 = vmatmul.f32.gmra.mxu0 %v418
        %v507 = vpop.f32.mrf.mxu0
        %v508 = vadd.f32 0.0, %v507
        %509 = vmatmul.f32.gmra.mxu0 %v420
        %v510 = vpop.f32.mrf.mxu0
        %v511 = vadd.f32 0.0, %v510
        %512 = vmatmul.f32.gmra.mxu0 %v422
        %v513 = vpop.f32.mrf.mxu0
        %v514 = vadd.f32 0.0, %v513
        %515 = vmatmul.f32.gmra.mxu0 %v424
        %v516 = vpop.f32.mrf.mxu0
        %v517 = vadd.f32 0.0, %v516
        %518 = vmatmul.f32.gmra.mxu0 %v426
        %v519 = vpop.f32.mrf.mxu0
        %v520 = vadd.f32 0.0, %v519
        %521 = vmatmul.f32.gmra.mxu0 %v428
        %v522 = vpop.f32.mrf.mxu0
        %v523 = vadd.f32 0.0, %v522
        %524 = vmatmul.f32.gmra.mxu0 %v430
        %v525 = vpop.f32.mrf.mxu0
        %v526 = vadd.f32 0.0, %v525
        %527 = vmatmul.f32.gmra.mxu0 %v432
        %v528 = vpop.f32.mrf.mxu0
        %v529 = vadd.f32 0.0, %v528
        %530 = vmatmul.f32.gmra.mxu0 %v434
        %v531 = vpop.f32.mrf.mxu0
        %v532 = vadd.f32 0.0, %v531
        %533 = vmatmul.f32.gmra.mxu0 %v436
        %v534 = vpop.f32.mrf.mxu0
        %v535 = vadd.f32 0.0, %v534
        %536 = vmatmul.f32.gmra.mxu0 %v438
        %v537 = vpop.f32.mrf.mxu0
        %v538 = vadd.f32 0.0, %v537
        %539 = vmatmul.f32.gmra.mxu0 %v440
        %v540 = vpop.f32.mrf.mxu0
        %v541 = vadd.f32 0.0, %v540
        %542 = vmatmul.f32.gmra.mxu0 %v442
        %v543 = vpop.f32.mrf.mxu0
        %v544 = vadd.f32 0.0, %v543
        %545 = vmatmul.f32.gmra.mxu0 %v444
        %v546 = vpop.f32.mrf.mxu0
        %v547 = vadd.f32 0.0, %v546
        %548 = vmatmul.f32.gmra.mxu0 %v446
        %v549 = vpop.f32.mrf.mxu0
        %v550 = vadd.f32 0.0, %v549
        %551 = vmatmul.f32.gmra.mxu0 %v448
        %v552 = vpop.f32.mrf.mxu0
        %v553 = vadd.f32 0.0, %v552
        %554 = vmatmul.f32.gmra.mxu0 %v450
        %v555 = vpop.f32.mrf.mxu0
        %v556 = vadd.f32 0.0, %v555
        %557 = vmatmul.f32.gmra.mxu0 %v452
        %v558 = vpop.f32.mrf.mxu0
        %v559 = vadd.f32 0.0, %v558
        %560 = vmatmul.f32.gmra.mxu0 %v454
        %v561 = vpop.f32.mrf.mxu0
        %v562 = vadd.f32 0.0, %v561
        %563 = vmatmul.f32.gmra.mxu0 %v456
        %v564 = vpop.f32.mrf.mxu0
        %v565 = vadd.f32 0.0, %v564
        %566 = vmatmul.f32.gmra.mxu0 %v458
        %v567 = vpop.f32.mrf.mxu0
        %v568 = vadd.f32 0.0, %v567
        %569 = vmatmul.f32.gmra.mxu0 %v460
        %v570 = vpop.f32.mrf.mxu0
        %v571 = vadd.f32 0.0, %v570
        %572 = vmatmul.f32.gmra.mxu0 %v462
        %v573 = vpop.f32.mrf.mxu0
        %v574 = vadd.f32 0.0, %v573
        %575 = vmatmul.f32.gmra.mxu0 %v464
        %v576 = vpop.f32.mrf.mxu0
        %v577 = vadd.f32 0.0, %v576
        %578 = vmatmul.f32.gmra.mxu0 %v466
        %v579 = vpop.f32.mrf.mxu0
        %v580 = vadd.f32 0.0, %v579
        %581 = vmatmul.f32.gmra.mxu0 %v468
        %v582 = vpop.f32.mrf.mxu0
        %v583 = vadd.f32 0.0, %v582
        %584 = vmatmul.f32.gmra.mxu0 %v470
        %v585 = vpop.f32.mrf.mxu0
        %v586 = vadd.f32 0.0, %v585
        %587 = vmatmul.f32.gmra.mxu0 %v472
        %v588 = vpop.f32.mrf.mxu0
        %v589 = vadd.f32 0.0, %v588
        %590 = vmatmul.f32.gmra.mxu0 %v474
        %v591 = vpop.f32.mrf.mxu0
        %v592 = vadd.f32 0.0, %v591
        %593 = vmatmul.f32.gmra.mxu0 %v476
        %v594 = vpop.f32.mrf.mxu0
        %v595 = vadd.f32 0.0, %v594
        %596 = vmatmul.f32.gmra.mxu0 %v478
        %v597 = vpop.f32.mrf.mxu0
        %v598 = vadd.f32 0.0, %v597
        %599 = vmatmul.f32.gmra.mxu0 %v480
        %v600 = vpop.f32.mrf.mxu0
        %v601 = vadd.f32 0.0, %v600
        %602 = vmatmul.f32.gmra.mxu0 %v482
        %v603 = vpop.f32.mrf.mxu0
        %v604 = vadd.f32 0.0, %v603
        %605 = vmatmul.f32.gmra.mxu0 %v484
        %v606 = vpop.f32.mrf.mxu0
        %v607 = vadd.f32 0.0, %v606
        %608 = vmatmul.f32.gmra.mxu0 %v486
        %v609 = vpop.f32.mrf.mxu0
        %v610 = vadd.f32 0.0, %v609
        %611 = vmatmul.f32.gmra.mxu0 %v488
        %v612 = vpop.f32.mrf.mxu0
        %v613 = vadd.f32 0.0, %v612
        %614 = vdwg.mxu0
        %615 = vmatpush.msra.mxu0 %v417
        %616 = vmatpush.msra.mxu0 %v416
        %617 = vmatpush.msra.mxu0 %v415
        %618 = vmatpush.msra.mxu0 %v414
        %619 = vmatpush.msra.mxu0 %v413
        %620 = vmatpush.msra.mxu0 %v412
        %621 = vmatpush.msra.mxu0 %v411
        %622 = vmatpush.msra.mxu0 %v410
        %623 = vmatpush.msra.mxu0 %v409
        %624 = vmatpush.msra.mxu0 %v408
        %625 = vmatpush.msra.mxu0 %v407
        %626 = vmatpush.msra.mxu0 %v406
        %627 = vmatpush.msra.mxu0 %v405
        %628 = vmatpush.msra.mxu0 %v404
        %629 = vmatpush.msra.mxu0 %v403
        %630 = vmatpush.msra.mxu0 %v402
        %631 = vmatmul.f32.gmra.mxu0 %v419
        %v632 = vpop.f32.mrf.mxu0
        %v633 = vadd.f32 %v508, %v632
        %634 = vmatmul.f32.gmra.mxu0 %v421
        %v635 = vpop.f32.mrf.mxu0
        %v636 = vadd.f32 %v511, %v635
        %637 = vmatmul.f32.gmra.mxu0 %v423
        %v638 = vpop.f32.mrf.mxu0
        %v639 = vadd.f32 %v514, %v638
        %640 = vmatmul.f32.gmra.mxu0 %v425
        %v641 = vpop.f32.mrf.mxu0
        %v642 = vadd.f32 %v517, %v641
        %643 = vmatmul.f32.gmra.mxu0 %v427
        %v644 = vpop.f32.mrf.mxu0
        %v645 = vadd.f32 %v520, %v644
        %646 = vmatmul.f32.gmra.mxu0 %v429
        %v647 = vpop.f32.mrf.mxu0
        %v648 = vadd.f32 %v523, %v647
        %649 = vmatmul.f32.gmra.mxu0 %v431
        %v650 = vpop.f32.mrf.mxu0
        %v651 = vadd.f32 %v526, %v650
        %652 = vmatmul.f32.gmra.mxu0 %v433
        %v653 = vpop.f32.mrf.mxu0
        %v654 = vadd.f32 %v529, %v653
        %655 = vmatmul.f32.gmra.mxu0 %v435
        %v656 = vpop.f32.mrf.mxu0
        %v657 = vadd.f32 %v532, %v656
        %658 = vmatmul.f32.gmra.mxu0 %v437
        %v659 = vpop.f32.mrf.mxu0
        %v660 = vadd.f32 %v535, %v659
        %661 = vmatmul.f32.gmra.mxu0 %v439
        %v662 = vpop.f32.mrf.mxu0
        %v663 = vadd.f32 %v538, %v662
        %664 = vmatmul.f32.gmra.mxu0 %v441
        %v665 = vpop.f32.mrf.mxu0
        %v666 = vadd.f32 %v541, %v665
        %667 = vmatmul.f32.gmra.mxu0 %v443
        %v668 = vpop.f32.mrf.mxu0
        %v669 = vadd.f32 %v544, %v668
        %670 = vmatmul.f32.gmra.mxu0 %v445
        %v671 = vpop.f32.mrf.mxu0
        %v672 = vadd.f32 %v547, %v671
        %673 = vmatmul.f32.gmra.mxu0 %v447
        %v674 = vpop.f32.mrf.mxu0
        %v675 = vadd.f32 %v550, %v674
        %676 = vmatmul.f32.gmra.mxu0 %v449
        %v677 = vpop.f32.mrf.mxu0
        %v678 = vadd.f32 %v553, %v677
        %679 = vmatmul.f32.gmra.mxu0 %v451
        %v680 = vpop.f32.mrf.mxu0
        %v681 = vadd.f32 %v556, %v680
        %682 = vmatmul.f32.gmra.mxu0 %v453
        %v683 = vpop.f32.mrf.mxu0
        %v684 = vadd.f32 %v559, %v683
        %685 = vmatmul.f32.gmra.mxu0 %v455
        %v686 = vpop.f32.mrf.mxu0
        %v687 = vadd.f32 %v562, %v686
        %688 = vmatmul.f32.gmra.mxu0 %v457
        %v689 = vpop.f32.mrf.mxu0
        %v690 = vadd.f32 %v565, %v689
        %691 = vmatmul.f32.gmra.mxu0 %v459
        %v692 = vpop.f32.mrf.mxu0
        %v693 = vadd.f32 %v568, %v692
        %694 = vmatmul.f32.gmra.mxu0 %v461
        %v695 = vpop.f32.mrf.mxu0
        %v696 = vadd.f32 %v571, %v695
        %697 = vmatmul.f32.gmra.mxu0 %v463
        %v698 = vpop.f32.mrf.mxu0
        %v699 = vadd.f32 %v574, %v698
        %700 = vmatmul.f32.gmra.mxu0 %v465
        %v701 = vpop.f32.mrf.mxu0
        %v702 = vadd.f32 %v577, %v701
        %703 = vmatmul.f32.gmra.mxu0 %v467
        %v704 = vpop.f32.mrf.mxu0
        %v705 = vadd.f32 %v580, %v704
        %706 = vmatmul.f32.gmra.mxu0 %v469
        %v707 = vpop.f32.mrf.mxu0
        %v708 = vadd.f32 %v583, %v707
        %709 = vmatmul.f32.gmra.mxu0 %v471
        %v710 = vpop.f32.mrf.mxu0
        %v711 = vadd.f32 %v586, %v710
        %712 = vmatmul.f32.gmra.mxu0 %v473
        %v713 = vpop.f32.mrf.mxu0
        %v714 = vadd.f32 %v589, %v713
        %715 = vmatmul.f32.gmra.mxu0 %v475
        %v716 = vpop.f32.mrf.mxu0
        %v717 = vadd.f32 %v592, %v716
        %718 = vmatmul.f32.gmra.mxu0 %v477
        %v719 = vpop.f32.mrf.mxu0
        %v720 = vadd.f32 %v595, %v719
        %721 = vmatmul.f32.gmra.mxu0 %v479
        %v722 = vpop.f32.mrf.mxu0
        %v723 = vadd.f32 %v598, %v722
        %724 = vmatmul.f32.gmra.mxu0 %v481
        %v725 = vpop.f32.mrf.mxu0
        %v726 = vadd.f32 %v601, %v725
        %727 = vmatmul.f32.gmra.mxu0 %v483
        %v728 = vpop.f32.mrf.mxu0
        %v729 = vadd.f32 %v604, %v728
        %730 = vmatmul.f32.gmra.mxu0 %v485
        %v731 = vpop.f32.mrf.mxu0
        %v732 = vadd.f32 %v607, %v731
        %733 = vmatmul.f32.gmra.mxu0 %v487
        %v734 = vpop.f32.mrf.mxu0
        %v735 = vadd.f32 %v610, %v734
        %736 = vmatmul.f32.gmra.mxu0 %v489
        %v737 = vpop.f32.mrf.mxu0
        %v738 = vadd.f32 %v613, %v737
        %739 = vdwg.mxu0
        %v740 = vld [vmem:[#allocation5] sm:$0xff]
        %v741 = vld [vmem:[#allocation5 + $0x8] sm:$0xff]
        %v742 = vld [vmem:[#allocation5 + $0x10] sm:$0xff]
        %v743 = vld [vmem:[#allocation5 + $0x18] sm:$0xff]
        %v744 = vld [vmem:[#allocation5 + $0x20] sm:$0xff]
        %v745 = vld [vmem:[#allocation5 + $0x28] sm:$0xff]
        %v746 = vld [vmem:[#allocation5 + $0x30] sm:$0xff]
        %v747 = vld [vmem:[#allocation5 + $0x38] sm:$0xff]
        %v748 = vld [vmem:[#allocation5 + $0x40] sm:$0xff]
        %v749 = vld [vmem:[#allocation5 + $0x48] sm:$0xff]
        %v750 = vld [vmem:[#allocation5 + $0x50] sm:$0xff]
        %v751 = vld [vmem:[#allocation5 + $0x58] sm:$0xff]
        %v752 = vld [vmem:[#allocation5 + $0x60] sm:$0xff]
        %v753 = vld [vmem:[#allocation5 + $0x68] sm:$0xff]
        %v754 = vld [vmem:[#allocation5 + $0x70] sm:$0xff]
        %v755 = vld [vmem:[#allocation5 + $0x78] sm:$0xff]
        %v756 = vld [vmem:[#allocation5 + $0x80] sm:$0xff]
        %v757 = vld [vmem:[#allocation5 + $0x88] sm:$0xff]
        %v758 = vld [vmem:[#allocation7] sm:$0xff]
        %v759 = vld [vmem:[#allocation7 + $0x8] sm:$0xff]
        %v760 = vld [vmem:[#allocation7 + $0x10] sm:$0xff]
        %v761 = vld [vmem:[#allocation7 + $0x18] sm:$0xff]
        %v762 = vld [vmem:[#allocation7 + $0x20] sm:$0xff]
        %v763 = vld [vmem:[#allocation7 + $0x28] sm:$0xff]
        %v764 = vld [vmem:[#allocation7 + $0x30] sm:$0xff]
        %v765 = vld [vmem:[#allocation7 + $0x38] sm:$0xff]
        %v766 = vld [vmem:[#allocation7 + $0x40] sm:$0xff]
        %v767 = vld [vmem:[#allocation7 + $0x48] sm:$0xff]
        %v768 = vld [vmem:[#allocation7 + $0x50] sm:$0xff]
        %v769 = vld [vmem:[#allocation7 + $0x58] sm:$0xff]
        %v770 = vld [vmem:[#allocation7 + $0x60] sm:$0xff]
        %v771 = vld [vmem:[#allocation7 + $0x68] sm:$0xff]
        %v772 = vld [vmem:[#allocation7 + $0x70] sm:$0xff]
        %v773 = vld [vmem:[#allocation7 + $0x78] sm:$0xff]
        %v774 = vld [vmem:[#allocation7 + $0x80] sm:$0xff]
        %v775 = vld [vmem:[#allocation7 + $0x88] sm:$0xff]
        %v776 = vmul.f32 %v633, %v740
        %v777 = vmul.f32 %v636, %v741
        %v778 = vmul.f32 %v639, %v742
        %v779 = vmul.f32 %v642, %v743
        %v780 = vmul.f32 %v645, %v744
        %v781 = vmul.f32 %v648, %v745
        %v782 = vmul.f32 %v651, %v746
        %v783 = vmul.f32 %v654, %v747
        %v784 = vmul.f32 %v657, %v748
        %v785 = vmul.f32 %v660, %v749
        %v786 = vmul.f32 %v663, %v750
        %v787 = vmul.f32 %v666, %v751
        %v788 = vmul.f32 %v669, %v752
        %v789 = vmul.f32 %v672, %v753
        %v790 = vmul.f32 %v675, %v754
        %v791 = vmul.f32 %v678, %v755
        %v792 = vmul.f32 %v681, %v756
        %v793 = vmul.f32 %v684, %v757
        %v794 = vmul.f32 %v687, %v758
        %v795 = vmul.f32 %v690, %v759
        %v796 = vmul.f32 %v693, %v760
        %v797 = vmul.f32 %v696, %v761
        %v798 = vmul.f32 %v699, %v762
        %v799 = vmul.f32 %v702, %v763
        %v800 = vmul.f32 %v705, %v764
        %v801 = vmul.f32 %v708, %v765
        %v802 = vmul.f32 %v711, %v766
        %v803 = vmul.f32 %v714, %v767
        %v804 = vmul.f32 %v717, %v768
        %v805 = vmul.f32 %v720, %v769
        %v806 = vmul.f32 %v723, %v770
        %v807 = vmul.f32 %v726, %v771
        %v808 = vmul.f32 %v729, %v772
        %v809 = vmul.f32 %v732, %v773
        %v810 = vmul.f32 %v735, %v774
        %v811 = vmul.f32 %v738, %v775
        %v812 = vsub.f32 %v776, %v794
        %v813 = vsub.f32 %v777, %v795
        %v814 = vsub.f32 %v778, %v796
        %v815 = vsub.f32 %v779, %v797
        %v816 = vsub.f32 %v780, %v798
        %v817 = vsub.f32 %v781, %v799
        %v818 = vsub.f32 %v782, %v800
        %v819 = vsub.f32 %v783, %v801
        %v820 = vsub.f32 %v784, %v802
        %v821 = vsub.f32 %v785, %v803
        %v822 = vsub.f32 %v786, %v804
        %v823 = vsub.f32 %v787, %v805
        %v824 = vsub.f32 %v788, %v806
        %v825 = vsub.f32 %v789, %v807
        %v826 = vsub.f32 %v790, %v808
        %v827 = vsub.f32 %v791, %v809
        %v828 = vsub.f32 %v792, %v810
        %v829 = vsub.f32 %v793, %v811
        %v830 = vmul.f32 %v633, %v758
        %v831 = vmul.f32 %v636, %v759
        %v832 = vmul.f32 %v639, %v760
        %v833 = vmul.f32 %v642, %v761
        %v834 = vmul.f32 %v645, %v762
        %v835 = vmul.f32 %v648, %v763
        %v836 = vmul.f32 %v651, %v764
        %v837 = vmul.f32 %v654, %v765
        %v838 = vmul.f32 %v657, %v766
        %v839 = vmul.f32 %v660, %v767
        %v840 = vmul.f32 %v663, %v768
        %v841 = vmul.f32 %v666, %v769
        %v842 = vmul.f32 %v669, %v770
        %v843 = vmul.f32 %v672, %v771
        %v844 = vmul.f32 %v675, %v772
        %v845 = vmul.f32 %v678, %v773
        %v846 = vmul.f32 %v681, %v774
        %v847 = vmul.f32 %v684, %v775
        %v848 = vmul.f32 %v687, %v740
        %v849 = vmul.f32 %v690, %v741
        %v850 = vmul.f32 %v693, %v742
        %v851 = vmul.f32 %v696, %v743
        %v852 = vmul.f32 %v699, %v744
        %v853 = vmul.f32 %v702, %v745
        %v854 = vmul.f32 %v705, %v746
        %v855 = vmul.f32 %v708, %v747
        %v856 = vmul.f32 %v711, %v748
        %v857 = vmul.f32 %v714, %v749
        %v858 = vmul.f32 %v717, %v750
        %v859 = vmul.f32 %v720, %v751
        %v860 = vmul.f32 %v723, %v752
        %v861 = vmul.f32 %v726, %v753
        %v862 = vmul.f32 %v729, %v754
        %v863 = vmul.f32 %v732, %v755
        %v864 = vmul.f32 %v735, %v756
        %v865 = vmul.f32 %v738, %v757
        %v866 = vadd.f32 %v830, %v848
        %v867 = vadd.f32 %v831, %v849
        %v868 = vadd.f32 %v832, %v850
        %v869 = vadd.f32 %v833, %v851
        %v870 = vadd.f32 %v834, %v852
        %v871 = vadd.f32 %v835, %v853
        %v872 = vadd.f32 %v836, %v854
        %v873 = vadd.f32 %v837, %v855
        %v874 = vadd.f32 %v838, %v856
        %v875 = vadd.f32 %v839, %v857
        %v876 = vadd.f32 %v840, %v858
        %v877 = vadd.f32 %v841, %v859
        %v878 = vadd.f32 %v842, %v860
        %v879 = vadd.f32 %v843, %v861
        %v880 = vadd.f32 %v844, %v862
        %v881 = vadd.f32 %v845, %v863
        %v882 = vadd.f32 %v846, %v864
        %v883 = vadd.f32 %v847, %v865
        %v884 = vld [vmem:[#allocation10] sm:$0xff]
        %v885 = vld [vmem:[#allocation10 + $0x8] sm:$0xff]
        %v886 = vld [vmem:[#allocation10 + $0x10] sm:$0xff]
        %v887 = vld [vmem:[#allocation10 + $0x18] sm:$0xff]
        %v888 = vld [vmem:[#allocation10 + $0x20] sm:$0xff]
        %v889 = vld [vmem:[#allocation10 + $0x28] sm:$0xff]
        %v890 = vld [vmem:[#allocation10 + $0x30] sm:$0xff]
        %v891 = vld [vmem:[#allocation10 + $0x38] sm:$0xff]
        %v892 = vld [vmem:[#allocation10 + $0x40] sm:$0xff]
        %v893 = vld [vmem:[#allocation10 + $0x48] sm:$0xff]
        %v894 = vld [vmem:[#allocation10 + $0x50] sm:$0xff]
        %v895 = vld [vmem:[#allocation10 + $0x58] sm:$0xff]
        %v896 = vld [vmem:[#allocation10 + $0x60] sm:$0xff]
        %v897 = vld [vmem:[#allocation10 + $0x68] sm:$0xff]
        %v898 = vld [vmem:[#allocation10 + $0x70] sm:$0xff]
        %v899 = vld [vmem:[#allocation10 + $0x78] sm:$0xff]
        %v900 = vld [vmem:[#allocation10 + $0x80] sm:$0xff]
        %v901 = vld [vmem:[#allocation10 + $0x88] sm:$0xff]
        %v902 = vld [vmem:[#allocation10 + $0x90] sm:$0xff]
        %v903 = vld [vmem:[#allocation10 + $0x98] sm:$0xff]
        %v904 = vld [vmem:[#allocation10 + $0xa0] sm:$0xff]
        %v905 = vld [vmem:[#allocation10 + $0xa8] sm:$0xff]
        %v906 = vld [vmem:[#allocation10 + $0xb0] sm:$0xff]
        %v907 = vld [vmem:[#allocation10 + $0xb8] sm:$0xff]
        %v908 = vld [vmem:[#allocation10 + $0xc0] sm:$0xff]
        %v909 = vld [vmem:[#allocation10 + $0xc8] sm:$0xff]
        %v910 = vld [vmem:[#allocation10 + $0xd0] sm:$0xff]
        %v911 = vld [vmem:[#allocation10 + $0xd8] sm:$0xff]
        %v912 = vld [vmem:[#allocation10 + $0xe0] sm:$0xff]
        %v913 = vld [vmem:[#allocation10 + $0xe8] sm:$0xff]
        %v914 = vld [vmem:[#allocation10 + $0xf0] sm:$0xff]
        %v915 = vld [vmem:[#allocation10 + $0xf8] sm:$0xff]
        %v916 = vld [vmem:[#allocation10 + $0x100] sm:$0xff]
        %v917 = vld [vmem:[#allocation10 + $0x108] sm:$0xff]
        %v918 = vld [vmem:[#allocation10 + $0x110] sm:$0xff]
        %v919 = vld [vmem:[#allocation10 + $0x118] sm:$0xff]
        %v920 = vld [vmem:[#allocation10 + $0x120] sm:$0xff]
        %v921 = vld [vmem:[#allocation10 + $0x128] sm:$0xff]
        %v922 = vld [vmem:[#allocation10 + $0x130] sm:$0xff]
        %v923 = vld [vmem:[#allocation10 + $0x138] sm:$0xff]
        %v924 = vld [vmem:[#allocation10 + $0x140] sm:$0xff]
        %v925 = vld [vmem:[#allocation10 + $0x148] sm:$0xff]
        %v926 = vld [vmem:[#allocation10 + $0x150] sm:$0xff]
        %v927 = vld [vmem:[#allocation10 + $0x158] sm:$0xff]
        %v928 = vld [vmem:[#allocation10 + $0x160] sm:$0xff]
        %v929 = vld [vmem:[#allocation10 + $0x168] sm:$0xff]
        %v930 = vld [vmem:[#allocation10 + $0x170] sm:$0xff]
        %v931 = vld [vmem:[#allocation10 + $0x178] sm:$0xff]
        %v932 = vld [vmem:[#allocation10 + $0x180] sm:$0xff]
        %v933 = vld [vmem:[#allocation10 + $0x188] sm:$0xff]
        %v934 = vld [vmem:[#allocation10 + $0x190] sm:$0xff]
        %v935 = vld [vmem:[#allocation10 + $0x198] sm:$0xff]
        %v936 = vld [vmem:[#allocation10 + $0x1a0] sm:$0xff]
        %v937 = vld [vmem:[#allocation10 + $0x1a8] sm:$0xff]
        %v938 = vld [vmem:[#allocation10 + $0x1b0] sm:$0xff]
        %v939 = vld [vmem:[#allocation10 + $0x1b8] sm:$0xff]
        %v940 = vld [vmem:[#allocation10 + $0x1c0] sm:$0xff]
        %v941 = vld [vmem:[#allocation10 + $0x1c8] sm:$0xff]
        %v942 = vld [vmem:[#allocation10 + $0x1d0] sm:$0xff]
        %v943 = vld [vmem:[#allocation10 + $0x1d8] sm:$0xff]
        %v944 = vld [vmem:[#allocation10 + $0x1e0] sm:$0xff]
        %v945 = vld [vmem:[#allocation10 + $0x1e8] sm:$0xff]
        %v946 = vld [vmem:[#allocation10 + $0x1f0] sm:$0xff]
        %v947 = vld [vmem:[#allocation10 + $0x1f8] sm:$0xff]
        %v948 = vld [vmem:[#allocation11] sm:$0xff]
        %v949 = vld [vmem:[#allocation11 + $0x8] sm:$0xff]
        %v950 = vld [vmem:[#allocation11 + $0x10] sm:$0xff]
        %v951 = vld [vmem:[#allocation11 + $0x18] sm:$0xff]
        %v952 = vld [vmem:[#allocation11 + $0x20] sm:$0xff]
        %v953 = vld [vmem:[#allocation11 + $0x28] sm:$0xff]
        %v954 = vld [vmem:[#allocation11 + $0x30] sm:$0xff]
        %v955 = vld [vmem:[#allocation11 + $0x38] sm:$0xff]
        %v956 = vld [vmem:[#allocation11 + $0x40] sm:$0xff]
        %v957 = vld [vmem:[#allocation11 + $0x48] sm:$0xff]
        %v958 = vld [vmem:[#allocation11 + $0x50] sm:$0xff]
        %v959 = vld [vmem:[#allocation11 + $0x58] sm:$0xff]
        %v960 = vld [vmem:[#allocation11 + $0x60] sm:$0xff]
        %v961 = vld [vmem:[#allocation11 + $0x68] sm:$0xff]
        %v962 = vld [vmem:[#allocation11 + $0x70] sm:$0xff]
        %v963 = vld [vmem:[#allocation11 + $0x78] sm:$0xff]
        %v964 = vld [vmem:[#allocation11 + $0x80] sm:$0xff]
        %v965 = vld [vmem:[#allocation11 + $0x88] sm:$0xff]
        %v966 = vld [vmem:[#allocation11 + $0x90] sm:$0xff]
        %v967 = vld [vmem:[#allocation11 + $0x98] sm:$0xff]
        %v968 = vld [vmem:[#allocation11 + $0xa0] sm:$0xff]
        %v969 = vld [vmem:[#allocation11 + $0xa8] sm:$0xff]
        %v970 = vld [vmem:[#allocation11 + $0xb0] sm:$0xff]
        %v971 = vld [vmem:[#allocation11 + $0xb8] sm:$0xff]
        %v972 = vld [vmem:[#allocation11 + $0xc0] sm:$0xff]
        %v973 = vld [vmem:[#allocation11 + $0xc8] sm:$0xff]
        %v974 = vld [vmem:[#allocation11 + $0xd0] sm:$0xff]
        %v975 = vld [vmem:[#allocation11 + $0xd8] sm:$0xff]
        %v976 = vld [vmem:[#allocation11 + $0xe0] sm:$0xff]
        %v977 = vld [vmem:[#allocation11 + $0xe8] sm:$0xff]
        %v978 = vld [vmem:[#allocation11 + $0xf0] sm:$0xff]
        %v979 = vld [vmem:[#allocation11 + $0xf8] sm:$0xff]
        %v980 = vld [vmem:[#allocation11 + $0x100] sm:$0xff]
        %v981 = vld [vmem:[#allocation11 + $0x108] sm:$0xff]
        %v982 = vld [vmem:[#allocation11 + $0x110] sm:$0xff]
        %v983 = vld [vmem:[#allocation11 + $0x118] sm:$0xff]
        %v984 = vld [vmem:[#allocation11 + $0x120] sm:$0xff]
        %v985 = vld [vmem:[#allocation11 + $0x128] sm:$0xff]
        %v986 = vld [vmem:[#allocation11 + $0x130] sm:$0xff]
        %v987 = vld [vmem:[#allocation11 + $0x138] sm:$0xff]
        %v988 = vld [vmem:[#allocation11 + $0x140] sm:$0xff]
        %v989 = vld [vmem:[#allocation11 + $0x148] sm:$0xff]
        %v990 = vld [vmem:[#allocation11 + $0x150] sm:$0xff]
        %v991 = vld [vmem:[#allocation11 + $0x158] sm:$0xff]
        %v992 = vld [vmem:[#allocation11 + $0x160] sm:$0xff]
        %v993 = vld [vmem:[#allocation11 + $0x168] sm:$0xff]
        %v994 = vld [vmem:[#allocation11 + $0x170] sm:$0xff]
        %v995 = vld [vmem:[#allocation11 + $0x178] sm:$0xff]
        %v996 = vld [vmem:[#allocation11 + $0x180] sm:$0xff]
        %v997 = vld [vmem:[#allocation11 + $0x188] sm:$0xff]
        %v998 = vld [vmem:[#allocation11 + $0x190] sm:$0xff]
        %v999 = vld [vmem:[#allocation11 + $0x198] sm:$0xff]
        %v1000 = vld [vmem:[#allocation11 + $0x1a0] sm:$0xff]
        %v1001 = vld [vmem:[#allocation11 + $0x1a8] sm:$0xff]
        %v1002 = vld [vmem:[#allocation11 + $0x1b0] sm:$0xff]
        %v1003 = vld [vmem:[#allocation11 + $0x1b8] sm:$0xff]
        %v1004 = vld [vmem:[#allocation11 + $0x1c0] sm:$0xff]
        %v1005 = vld [vmem:[#allocation11 + $0x1c8] sm:$0xff]
        %v1006 = vld [vmem:[#allocation11 + $0x1d0] sm:$0xff]
        %v1007 = vld [vmem:[#allocation11 + $0x1d8] sm:$0xff]
        %v1008 = vld [vmem:[#allocation11 + $0x1e0] sm:$0xff]
        %v1009 = vld [vmem:[#allocation11 + $0x1e8] sm:$0xff]
        %v1010 = vld [vmem:[#allocation11 + $0x1f0] sm:$0xff]
        %v1011 = vld [vmem:[#allocation11 + $0x1f8] sm:$0xff]
        %vm1012 = vcmask 130048
        %v1014 = vsel %vm1012, %v949, 0
        %v1017 = vsel %vm1012, %v951, 0
        %v1020 = vsel %vm1012, %v953, 0
        %v1023 = vsel %vm1012, %v955, 0
        %v1026 = vsel %vm1012, %v957, 0
        %v1029 = vsel %vm1012, %v959, 0
        %v1032 = vsel %vm1012, %v961, 0
        %v1035 = vsel %vm1012, %v963, 0
        %v1038 = vsel %vm1012, %v965, 0
        %v1041 = vsel %vm1012, %v967, 0
        %v1044 = vsel %vm1012, %v969, 0
        %v1047 = vsel %vm1012, %v971, 0
        %v1050 = vsel %vm1012, %v973, 0
        %v1053 = vsel %vm1012, %v975, 0
        %v1056 = vsel %vm1012, %v977, 0
        %v1059 = vsel %vm1012, %v979, 0
        %v1062 = vsel %vm1012, %v981, 0
        %v1065 = vsel %vm1012, %v983, 0
        %v1068 = vsel %vm1012, %v985, 0
        %v1071 = vsel %vm1012, %v987, 0
        %v1074 = vsel %vm1012, %v989, 0
        %v1077 = vsel %vm1012, %v991, 0
        %v1080 = vsel %vm1012, %v993, 0
        %v1083 = vsel %vm1012, %v995, 0
        %v1086 = vsel %vm1012, %v997, 0
        %v1089 = vsel %vm1012, %v999, 0
        %v1092 = vsel %vm1012, %v1001, 0
        %v1095 = vsel %vm1012, %v1003, 0
        %v1098 = vsel %vm1012, %v1005, 0
        %v1101 = vsel %vm1012, %v1007, 0
        %v1104 = vsel %vm1012, %v1009, 0
        %v1107 = vsel %vm1012, %v1011, 0
        %1109 = vmatpush.msra.mxu0 %v881
        %1110 = vmatpush.msra.mxu0 %v880
        %1111 = vmatpush.msra.mxu0 %v879
        %1112 = vmatpush.msra.mxu0 %v878
        %1113 = vmatpush.msra.mxu0 %v877
        %1114 = vmatpush.msra.mxu0 %v876
        %1115 = vmatpush.msra.mxu0 %v875
        %1116 = vmatpush.msra.mxu0 %v874
        %1117 = vmatpush.msra.mxu0 %v873
        %1118 = vmatpush.msra.mxu0 %v872
        %1119 = vmatpush.msra.mxu0 %v871
        %1120 = vmatpush.msra.mxu0 %v870
        %1121 = vmatpush.msra.mxu0 %v869
        %1122 = vmatpush.msra.mxu0 %v868
        %1123 = vmatpush.msra.mxu0 %v867
        %1124 = vmatpush.msra.mxu0 %v866
        %1125 = vmatmul.f32.gmra.mxu0 %v948
        %v1126 = vpop.f32.mrf.mxu0
        %v1127 = vadd.f32 0.0, %v1126
        %1128 = vmatmul.f32.gmra.mxu0 %v950
        %v1129 = vpop.f32.mrf.mxu0
        %v1130 = vadd.f32 0.0, %v1129
        %1131 = vmatmul.f32.gmra.mxu0 %v952
        %v1132 = vpop.f32.mrf.mxu0
        %v1133 = vadd.f32 0.0, %v1132
        %1134 = vmatmul.f32.gmra.mxu0 %v954
        %v1135 = vpop.f32.mrf.mxu0
        %v1136 = vadd.f32 0.0, %v1135
        %1137 = vmatmul.f32.gmra.mxu0 %v956
        %v1138 = vpop.f32.mrf.mxu0
        %v1139 = vadd.f32 0.0, %v1138
        %1140 = vmatmul.f32.gmra.mxu0 %v958
        %v1141 = vpop.f32.mrf.mxu0
        %v1142 = vadd.f32 0.0, %v1141
        %1143 = vmatmul.f32.gmra.mxu0 %v960
        %v1144 = vpop.f32.mrf.mxu0
        %v1145 = vadd.f32 0.0, %v1144
        %1146 = vmatmul.f32.gmra.mxu0 %v962
        %v1147 = vpop.f32.mrf.mxu0
        %v1148 = vadd.f32 0.0, %v1147
        %1149 = vmatmul.f32.gmra.mxu0 %v964
        %v1150 = vpop.f32.mrf.mxu0
        %v1151 = vadd.f32 0.0, %v1150
        %1152 = vmatmul.f32.gmra.mxu0 %v966
        %v1153 = vpop.f32.mrf.mxu0
        %v1154 = vadd.f32 0.0, %v1153
        %1155 = vmatmul.f32.gmra.mxu0 %v968
        %v1156 = vpop.f32.mrf.mxu0
        %v1157 = vadd.f32 0.0, %v1156
        %1158 = vmatmul.f32.gmra.mxu0 %v970
        %v1159 = vpop.f32.mrf.mxu0
        %v1160 = vadd.f32 0.0, %v1159
        %1161 = vmatmul.f32.gmra.mxu0 %v972
        %v1162 = vpop.f32.mrf.mxu0
        %v1163 = vadd.f32 0.0, %v1162
        %1164 = vmatmul.f32.gmra.mxu0 %v974
        %v1165 = vpop.f32.mrf.mxu0
        %v1166 = vadd.f32 0.0, %v1165
        %1167 = vmatmul.f32.gmra.mxu0 %v976
        %v1168 = vpop.f32.mrf.mxu0
        %v1169 = vadd.f32 0.0, %v1168
        %1170 = vmatmul.f32.gmra.mxu0 %v978
        %v1171 = vpop.f32.mrf.mxu0
        %v1172 = vadd.f32 0.0, %v1171
        %1173 = vmatmul.f32.gmra.mxu0 %v980
        %v1174 = vpop.f32.mrf.mxu0
        %v1175 = vadd.f32 0.0, %v1174
        %1176 = vmatmul.f32.gmra.mxu0 %v982
        %v1177 = vpop.f32.mrf.mxu0
        %v1178 = vadd.f32 0.0, %v1177
        %1179 = vmatmul.f32.gmra.mxu0 %v984
        %v1180 = vpop.f32.mrf.mxu0
        %v1181 = vadd.f32 0.0, %v1180
        %1182 = vmatmul.f32.gmra.mxu0 %v986
        %v1183 = vpop.f32.mrf.mxu0
        %v1184 = vadd.f32 0.0, %v1183
        %1185 = vmatmul.f32.gmra.mxu0 %v988
        %v1186 = vpop.f32.mrf.mxu0
        %v1187 = vadd.f32 0.0, %v1186
        %1188 = vmatmul.f32.gmra.mxu0 %v990
        %v1189 = vpop.f32.mrf.mxu0
        %v1190 = vadd.f32 0.0, %v1189
        %1191 = vmatmul.f32.gmra.mxu0 %v992
        %v1192 = vpop.f32.mrf.mxu0
        %v1193 = vadd.f32 0.0, %v1192
        %1194 = vmatmul.f32.gmra.mxu0 %v994
        %v1195 = vpop.f32.mrf.mxu0
        %v1196 = vadd.f32 0.0, %v1195
        %1197 = vmatmul.f32.gmra.mxu0 %v996
        %v1198 = vpop.f32.mrf.mxu0
        %v1199 = vadd.f32 0.0, %v1198
        %1200 = vmatmul.f32.gmra.mxu0 %v998
        %v1201 = vpop.f32.mrf.mxu0
        %v1202 = vadd.f32 0.0, %v1201
        %1203 = vmatmul.f32.gmra.mxu0 %v1000
        %v1204 = vpop.f32.mrf.mxu0
        %v1205 = vadd.f32 0.0, %v1204
        %1206 = vmatmul.f32.gmra.mxu0 %v1002
        %v1207 = vpop.f32.mrf.mxu0
        %v1208 = vadd.f32 0.0, %v1207
        %1209 = vmatmul.f32.gmra.mxu0 %v1004
        %v1210 = vpop.f32.mrf.mxu0
        %v1211 = vadd.f32 0.0, %v1210
        %1212 = vmatmul.f32.gmra.mxu0 %v1006
        %v1213 = vpop.f32.mrf.mxu0
        %v1214 = vadd.f32 0.0, %v1213
        %1215 = vmatmul.f32.gmra.mxu0 %v1008
        %v1216 = vpop.f32.mrf.mxu0
        %v1217 = vadd.f32 0.0, %v1216
        %1218 = vmatmul.f32.gmra.mxu0 %v1010
        %v1219 = vpop.f32.mrf.mxu0
        %v1220 = vadd.f32 0.0, %v1219
        %1221 = vdwg.mxu0
        %1222 = vmatpush.msra.mxu0 0.0
        %1223 = vmatpush.msra.mxu0 0.0
        %1224 = vmatpush.msra.mxu0 0.0
        %1225 = vmatpush.msra.mxu0 0.0
        %1226 = vmatpush.msra.mxu0 0.0
        %1227 = vmatpush.msra.mxu0 0.0
        %1228 = vmatpush.msra.mxu0 0.0
        %1229 = vmatpush.msra.mxu0 0.0
        %1230 = vmatpush.msra.mxu0 0.0
        %1231 = vmatpush.msra.mxu0 0.0
        %1232 = vmatpush.msra.mxu0 0.0
        %1233 = vmatpush.msra.mxu0 0.0
        %1234 = vmatpush.msra.mxu0 0.0
        %1235 = vmatpush.msra.mxu0 0.0
        %1236 = vmatpush.msra.mxu0 %v883
        %1237 = vmatpush.msra.mxu0 %v882
        %1238 = vmatmul.f32.gmra.mxu0 %v1014
        %v1239 = vpop.f32.mrf.mxu0
        %v1240 = vadd.f32 %v1127, %v1239
        %1241 = vmatmul.f32.gmra.mxu0 %v1017
        %v1242 = vpop.f32.mrf.mxu0
        %v1243 = vadd.f32 %v1130, %v1242
        %1244 = vmatmul.f32.gmra.mxu0 %v1020
        %v1245 = vpop.f32.mrf.mxu0
        %v1246 = vadd.f32 %v1133, %v1245
        %1247 = vmatmul.f32.gmra.mxu0 %v1023
        %v1248 = vpop.f32.mrf.mxu0
        %v1249 = vadd.f32 %v1136, %v1248
        %1250 = vmatmul.f32.gmra.mxu0 %v1026
        %v1251 = vpop.f32.mrf.mxu0
        %v1252 = vadd.f32 %v1139, %v1251
        %1253 = vmatmul.f32.gmra.mxu0 %v1029
        %v1254 = vpop.f32.mrf.mxu0
        %v1255 = vadd.f32 %v1142, %v1254
        %1256 = vmatmul.f32.gmra.mxu0 %v1032
        %v1257 = vpop.f32.mrf.mxu0
        %v1258 = vadd.f32 %v1145, %v1257
        %1259 = vmatmul.f32.gmra.mxu0 %v1035
        %v1260 = vpop.f32.mrf.mxu0
        %v1261 = vadd.f32 %v1148, %v1260
        %1262 = vmatmul.f32.gmra.mxu0 %v1038
        %v1263 = vpop.f32.mrf.mxu0
        %v1264 = vadd.f32 %v1151, %v1263
        %1265 = vmatmul.f32.gmra.mxu0 %v1041
        %v1266 = vpop.f32.mrf.mxu0
        %v1267 = vadd.f32 %v1154, %v1266
        %1268 = vmatmul.f32.gmra.mxu0 %v1044
        %v1269 = vpop.f32.mrf.mxu0
        %v1270 = vadd.f32 %v1157, %v1269
        %1271 = vmatmul.f32.gmra.mxu0 %v1047
        %v1272 = vpop.f32.mrf.mxu0
        %v1273 = vadd.f32 %v1160, %v1272
        %1274 = vmatmul.f32.gmra.mxu0 %v1050
        %v1275 = vpop.f32.mrf.mxu0
        %v1276 = vadd.f32 %v1163, %v1275
        %1277 = vmatmul.f32.gmra.mxu0 %v1053
        %v1278 = vpop.f32.mrf.mxu0
        %v1279 = vadd.f32 %v1166, %v1278
        %1280 = vmatmul.f32.gmra.mxu0 %v1056
        %v1281 = vpop.f32.mrf.mxu0
        %v1282 = vadd.f32 %v1169, %v1281
        %1283 = vmatmul.f32.gmra.mxu0 %v1059
        %v1284 = vpop.f32.mrf.mxu0
        %v1285 = vadd.f32 %v1172, %v1284
        %1286 = vmatmul.f32.gmra.mxu0 %v1062
        %v1287 = vpop.f32.mrf.mxu0
        %v1288 = vadd.f32 %v1175, %v1287
        %1289 = vmatmul.f32.gmra.mxu0 %v1065
        %v1290 = vpop.f32.mrf.mxu0
        %v1291 = vadd.f32 %v1178, %v1290
        %1292 = vmatmul.f32.gmra.mxu0 %v1068
        %v1293 = vpop.f32.mrf.mxu0
        %v1294 = vadd.f32 %v1181, %v1293
        %1295 = vmatmul.f32.gmra.mxu0 %v1071
        %v1296 = vpop.f32.mrf.mxu0
        %v1297 = vadd.f32 %v1184, %v1296
        %1298 = vmatmul.f32.gmra.mxu0 %v1074
        %v1299 = vpop.f32.mrf.mxu0
        %v1300 = vadd.f32 %v1187, %v1299
        %1301 = vmatmul.f32.gmra.mxu0 %v1077
        %v1302 = vpop.f32.mrf.mxu0
        %v1303 = vadd.f32 %v1190, %v1302
        %1304 = vmatmul.f32.gmra.mxu0 %v1080
        %v1305 = vpop.f32.mrf.mxu0
        %v1306 = vadd.f32 %v1193, %v1305
        %1307 = vmatmul.f32.gmra.mxu0 %v1083
        %v1308 = vpop.f32.mrf.mxu0
        %v1309 = vadd.f32 %v1196, %v1308
        %1310 = vmatmul.f32.gmra.mxu0 %v1086
        %v1311 = vpop.f32.mrf.mxu0
        %v1312 = vadd.f32 %v1199, %v1311
        %1313 = vmatmul.f32.gmra.mxu0 %v1089
        %v1314 = vpop.f32.mrf.mxu0
        %v1315 = vadd.f32 %v1202, %v1314
        %1316 = vmatmul.f32.gmra.mxu0 %v1092
        %v1317 = vpop.f32.mrf.mxu0
        %v1318 = vadd.f32 %v1205, %v1317
        %1319 = vmatmul.f32.gmra.mxu0 %v1095
        %v1320 = vpop.f32.mrf.mxu0
        %v1321 = vadd.f32 %v1208, %v1320
        %1322 = vmatmul.f32.gmra.mxu0 %v1098
        %v1323 = vpop.f32.mrf.mxu0
        %v1324 = vadd.f32 %v1211, %v1323
        %1325 = vmatmul.f32.gmra.mxu0 %v1101
        %v1326 = vpop.f32.mrf.mxu0
        %v1327 = vadd.f32 %v1214, %v1326
        %1328 = vmatmul.f32.gmra.mxu0 %v1104
        %v1329 = vpop.f32.mrf.mxu0
        %v1330 = vadd.f32 %v1217, %v1329
        %1331 = vmatmul.f32.gmra.mxu0 %v1107
        %v1332 = vpop.f32.mrf.mxu0
        %v1333 = vadd.f32 %v1220, %v1332
        %1334 = vdwg.mxu0
        %v1336 = vsel %vm1012, %v885, 0
        %v1339 = vsel %vm1012, %v887, 0
        %v1342 = vsel %vm1012, %v889, 0
        %v1345 = vsel %vm1012, %v891, 0
        %v1348 = vsel %vm1012, %v893, 0
        %v1351 = vsel %vm1012, %v895, 0
        %v1354 = vsel %vm1012, %v897, 0
        %v1357 = vsel %vm1012, %v899, 0
        %v1360 = vsel %vm1012, %v901, 0
        %v1363 = vsel %vm1012, %v903, 0
        %v1366 = vsel %vm1012, %v905, 0
        %v1369 = vsel %vm1012, %v907, 0
        %v1372 = vsel %vm1012, %v909, 0
        %v1375 = vsel %vm1012, %v911, 0
        %v1378 = vsel %vm1012, %v913, 0
        %v1381 = vsel %vm1012, %v915, 0
        %v1384 = vsel %vm1012, %v917, 0
        %v1387 = vsel %vm1012, %v919, 0
        %v1390 = vsel %vm1012, %v921, 0
        %v1393 = vsel %vm1012, %v923, 0
        %v1396 = vsel %vm1012, %v925, 0
        %v1399 = vsel %vm1012, %v927, 0
        %v1402 = vsel %vm1012, %v929, 0
        %v1405 = vsel %vm1012, %v931, 0
        %v1408 = vsel %vm1012, %v933, 0
        %v1411 = vsel %vm1012, %v935, 0
        %v1414 = vsel %vm1012, %v937, 0
        %v1417 = vsel %vm1012, %v939, 0
        %v1420 = vsel %vm1012, %v941, 0
        %v1423 = vsel %vm1012, %v943, 0
        %v1426 = vsel %vm1012, %v945, 0
        %v1429 = vsel %vm1012, %v947, 0
        %1431 = vmatpush.msra.mxu0 %v827
        %1432 = vmatpush.msra.mxu0 %v826
        %1433 = vmatpush.msra.mxu0 %v825
        %1434 = vmatpush.msra.mxu0 %v824
        %1435 = vmatpush.msra.mxu0 %v823
        %1436 = vmatpush.msra.mxu0 %v822
        %1437 = vmatpush.msra.mxu0 %v821
        %1438 = vmatpush.msra.mxu0 %v820
        %1439 = vmatpush.msra.mxu0 %v819
        %1440 = vmatpush.msra.mxu0 %v818
        %1441 = vmatpush.msra.mxu0 %v817
        %1442 = vmatpush.msra.mxu0 %v816
        %1443 = vmatpush.msra.mxu0 %v815
        %1444 = vmatpush.msra.mxu0 %v814
        %1445 = vmatpush.msra.mxu0 %v813
        %1446 = vmatpush.msra.mxu0 %v812
        %1447 = vmatmul.f32.gmra.mxu0 %v884
        %v1448 = vpop.f32.mrf.mxu0
        %v1449 = vadd.f32 %v1240, %v1448
        %1450 = vmatmul.f32.gmra.mxu0 %v886
        %v1451 = vpop.f32.mrf.mxu0
        %v1452 = vadd.f32 %v1243, %v1451
        %1453 = vmatmul.f32.gmra.mxu0 %v888
        %v1454 = vpop.f32.mrf.mxu0
        %v1455 = vadd.f32 %v1246, %v1454
        %1456 = vmatmul.f32.gmra.mxu0 %v890
        %v1457 = vpop.f32.mrf.mxu0
        %v1458 = vadd.f32 %v1249, %v1457
        %1459 = vmatmul.f32.gmra.mxu0 %v892
        %v1460 = vpop.f32.mrf.mxu0
        %v1461 = vadd.f32 %v1252, %v1460
        %1462 = vmatmul.f32.gmra.mxu0 %v894
        %v1463 = vpop.f32.mrf.mxu0
        %v1464 = vadd.f32 %v1255, %v1463
        %1465 = vmatmul.f32.gmra.mxu0 %v896
        %v1466 = vpop.f32.mrf.mxu0
        %v1467 = vadd.f32 %v1258, %v1466
        %1468 = vmatmul.f32.gmra.mxu0 %v898
        %v1469 = vpop.f32.mrf.mxu0
        %v1470 = vadd.f32 %v1261, %v1469
        %1471 = vmatmul.f32.gmra.mxu0 %v900
        %v1472 = vpop.f32.mrf.mxu0
        %v1473 = vadd.f32 %v1264, %v1472
        %1474 = vmatmul.f32.gmra.mxu0 %v902
        %v1475 = vpop.f32.mrf.mxu0
        %v1476 = vadd.f32 %v1267, %v1475
        %1477 = vmatmul.f32.gmra.mxu0 %v904
        %v1478 = vpop.f32.mrf.mxu0
        %v1479 = vadd.f32 %v1270, %v1478
        %1480 = vmatmul.f32.gmra.mxu0 %v906
        %v1481 = vpop.f32.mrf.mxu0
        %v1482 = vadd.f32 %v1273, %v1481
        %1483 = vmatmul.f32.gmra.mxu0 %v908
        %v1484 = vpop.f32.mrf.mxu0
        %v1485 = vadd.f32 %v1276, %v1484
        %1486 = vmatmul.f32.gmra.mxu0 %v910
        %v1487 = vpop.f32.mrf.mxu0
        %v1488 = vadd.f32 %v1279, %v1487
        %1489 = vmatmul.f32.gmra.mxu0 %v912
        %v1490 = vpop.f32.mrf.mxu0
        %v1491 = vadd.f32 %v1282, %v1490
        %1492 = vmatmul.f32.gmra.mxu0 %v914
        %v1493 = vpop.f32.mrf.mxu0
        %v1494 = vadd.f32 %v1285, %v1493
        %1495 = vmatmul.f32.gmra.mxu0 %v916
        %v1496 = vpop.f32.mrf.mxu0
        %v1497 = vadd.f32 %v1288, %v1496
        %1498 = vmatmul.f32.gmra.mxu0 %v918
        %v1499 = vpop.f32.mrf.mxu0
        %v1500 = vadd.f32 %v1291, %v1499
        %1501 = vmatmul.f32.gmra.mxu0 %v920
        %v1502 = vpop.f32.mrf.mxu0
        %v1503 = vadd.f32 %v1294, %v1502
        %1504 = vmatmul.f32.gmra.mxu0 %v922
        %v1505 = vpop.f32.mrf.mxu0
        %v1506 = vadd.f32 %v1297, %v1505
        %1507 = vmatmul.f32.gmra.mxu0 %v924
        %v1508 = vpop.f32.mrf.mxu0
        %v1509 = vadd.f32 %v1300, %v1508
        %1510 = vmatmul.f32.gmra.mxu0 %v926
        %v1511 = vpop.f32.mrf.mxu0
        %v1512 = vadd.f32 %v1303, %v1511
        %1513 = vmatmul.f32.gmra.mxu0 %v928
        %v1514 = vpop.f32.mrf.mxu0
        %v1515 = vadd.f32 %v1306, %v1514
        %1516 = vmatmul.f32.gmra.mxu0 %v930
        %v1517 = vpop.f32.mrf.mxu0
        %v1518 = vadd.f32 %v1309, %v1517
        %1519 = vmatmul.f32.gmra.mxu0 %v932
        %v1520 = vpop.f32.mrf.mxu0
        %v1521 = vadd.f32 %v1312, %v1520
        %1522 = vmatmul.f32.gmra.mxu0 %v934
        %v1523 = vpop.f32.mrf.mxu0
        %v1524 = vadd.f32 %v1315, %v1523
        %1525 = vmatmul.f32.gmra.mxu0 %v936
        %v1526 = vpop.f32.mrf.mxu0
        %v1527 = vadd.f32 %v1318, %v1526
        %1528 = vmatmul.f32.gmra.mxu0 %v938
        %v1529 = vpop.f32.mrf.mxu0
        %v1530 = vadd.f32 %v1321, %v1529
        %1531 = vmatmul.f32.gmra.mxu0 %v940
        %v1532 = vpop.f32.mrf.mxu0
        %v1533 = vadd.f32 %v1324, %v1532
        %1534 = vmatmul.f32.gmra.mxu0 %v942
        %v1535 = vpop.f32.mrf.mxu0
        %v1536 = vadd.f32 %v1327, %v1535
        %1537 = vmatmul.f32.gmra.mxu0 %v944
        %v1538 = vpop.f32.mrf.mxu0
        %v1539 = vadd.f32 %v1330, %v1538
        %1540 = vmatmul.f32.gmra.mxu0 %v946
        %v1541 = vpop.f32.mrf.mxu0
        %v1542 = vadd.f32 %v1333, %v1541
        %1543 = vdwg.mxu0
        %1544 = vmatpush.msra.mxu0 0.0
        %1545 = vmatpush.msra.mxu0 0.0
        %1546 = vmatpush.msra.mxu0 0.0
        %1547 = vmatpush.msra.mxu0 0.0
        %1548 = vmatpush.msra.mxu0 0.0
        %1549 = vmatpush.msra.mxu0 0.0
        %1550 = vmatpush.msra.mxu0 0.0
        %1551 = vmatpush.msra.mxu0 0.0
        %1552 = vmatpush.msra.mxu0 0.0
        %1553 = vmatpush.msra.mxu0 0.0
        %1554 = vmatpush.msra.mxu0 0.0
        %1555 = vmatpush.msra.mxu0 0.0
        %1556 = vmatpush.msra.mxu0 0.0
        %1557 = vmatpush.msra.mxu0 0.0
        %1558 = vmatpush.msra.mxu0 %v829
        %1559 = vmatpush.msra.mxu0 %v828
        %1560 = vmatmul.f32.gmra.mxu0 %v1336
        %v1561 = vpop.f32.mrf.mxu0
        %v1562 = vadd.f32 %v1449, %v1561
        %1563 = vmatmul.f32.gmra.mxu0 %v1339
        %v1564 = vpop.f32.mrf.mxu0
        %v1565 = vadd.f32 %v1452, %v1564
        %1566 = vmatmul.f32.gmra.mxu0 %v1342
        %v1567 = vpop.f32.mrf.mxu0
        %v1568 = vadd.f32 %v1455, %v1567
        %1569 = vmatmul.f32.gmra.mxu0 %v1345
        %v1570 = vpop.f32.mrf.mxu0
        %v1571 = vadd.f32 %v1458, %v1570
        %1572 = vmatmul.f32.gmra.mxu0 %v1348
        %v1573 = vpop.f32.mrf.mxu0
        %v1574 = vadd.f32 %v1461, %v1573
        %1575 = vmatmul.f32.gmra.mxu0 %v1351
        %v1576 = vpop.f32.mrf.mxu0
        %v1577 = vadd.f32 %v1464, %v1576
        %1578 = vmatmul.f32.gmra.mxu0 %v1354
        %v1579 = vpop.f32.mrf.mxu0
        %v1580 = vadd.f32 %v1467, %v1579
        %1581 = vmatmul.f32.gmra.mxu0 %v1357
        %v1582 = vpop.f32.mrf.mxu0
        %v1583 = vadd.f32 %v1470, %v1582
        %1584 = vmatmul.f32.gmra.mxu0 %v1360
        %v1585 = vpop.f32.mrf.mxu0
        %v1586 = vadd.f32 %v1473, %v1585
        %1587 = vmatmul.f32.gmra.mxu0 %v1363
        %v1588 = vpop.f32.mrf.mxu0
        %v1589 = vadd.f32 %v1476, %v1588
        %1590 = vmatmul.f32.gmra.mxu0 %v1366
        %v1591 = vpop.f32.mrf.mxu0
        %v1592 = vadd.f32 %v1479, %v1591
        %1593 = vmatmul.f32.gmra.mxu0 %v1369
        %v1594 = vpop.f32.mrf.mxu0
        %v1595 = vadd.f32 %v1482, %v1594
        %1596 = vmatmul.f32.gmra.mxu0 %v1372
        %v1597 = vpop.f32.mrf.mxu0
        %v1598 = vadd.f32 %v1485, %v1597
        %1599 = vmatmul.f32.gmra.mxu0 %v1375
        %v1600 = vpop.f32.mrf.mxu0
        %v1601 = vadd.f32 %v1488, %v1600
        %1602 = vmatmul.f32.gmra.mxu0 %v1378
        %v1603 = vpop.f32.mrf.mxu0
        %v1604 = vadd.f32 %v1491, %v1603
        %1605 = vmatmul.f32.gmra.mxu0 %v1381
        %v1606 = vpop.f32.mrf.mxu0
        %v1607 = vadd.f32 %v1494, %v1606
        %1608 = vmatmul.f32.gmra.mxu0 %v1384
        %v1609 = vpop.f32.mrf.mxu0
        %v1610 = vadd.f32 %v1497, %v1609
        %1611 = vmatmul.f32.gmra.mxu0 %v1387
        %v1612 = vpop.f32.mrf.mxu0
        %v1613 = vadd.f32 %v1500, %v1612
        %1614 = vmatmul.f32.gmra.mxu0 %v1390
        %v1615 = vpop.f32.mrf.mxu0
        %v1616 = vadd.f32 %v1503, %v1615
        %1617 = vmatmul.f32.gmra.mxu0 %v1393
        %v1618 = vpop.f32.mrf.mxu0
        %v1619 = vadd.f32 %v1506, %v1618
        %1620 = vmatmul.f32.gmra.mxu0 %v1396
        %v1621 = vpop.f32.mrf.mxu0
        %v1622 = vadd.f32 %v1509, %v1621
        %1623 = vmatmul.f32.gmra.mxu0 %v1399
        %v1624 = vpop.f32.mrf.mxu0
        %v1625 = vadd.f32 %v1512, %v1624
        %1626 = vmatmul.f32.gmra.mxu0 %v1402
        %v1627 = vpop.f32.mrf.mxu0
        %v1628 = vadd.f32 %v1515, %v1627
        %1629 = vmatmul.f32.gmra.mxu0 %v1405
        %v1630 = vpop.f32.mrf.mxu0
        %v1631 = vadd.f32 %v1518, %v1630
        %1632 = vmatmul.f32.gmra.mxu0 %v1408
        %v1633 = vpop.f32.mrf.mxu0
        %v1634 = vadd.f32 %v1521, %v1633
        %1635 = vmatmul.f32.gmra.mxu0 %v1411
        %v1636 = vpop.f32.mrf.mxu0
        %v1637 = vadd.f32 %v1524, %v1636
        %1638 = vmatmul.f32.gmra.mxu0 %v1414
        %v1639 = vpop.f32.mrf.mxu0
        %v1640 = vadd.f32 %v1527, %v1639
        %1641 = vmatmul.f32.gmra.mxu0 %v1417
        %v1642 = vpop.f32.mrf.mxu0
        %v1643 = vadd.f32 %v1530, %v1642
        %1644 = vmatmul.f32.gmra.mxu0 %v1420
        %v1645 = vpop.f32.mrf.mxu0
        %v1646 = vadd.f32 %v1533, %v1645
        %1647 = vmatmul.f32.gmra.mxu0 %v1423
        %v1648 = vpop.f32.mrf.mxu0
        %v1649 = vadd.f32 %v1536, %v1648
        %1650 = vmatmul.f32.gmra.mxu0 %v1426
        %v1651 = vpop.f32.mrf.mxu0
        %v1652 = vadd.f32 %v1539, %v1651
        %1653 = vmatmul.f32.gmra.mxu0 %v1429
        %v1654 = vpop.f32.mrf.mxu0
        %v1655 = vadd.f32 %v1542, %v1654
        %1656 = vdwg.mxu0
        %vm1657 = vcmask 261120
        %1658 = vst.msk [vmem:[%s385] sm:$0xff] %vm1657, %v1562
        %1659 = vst.msk [vmem:[%s385 + $0x8] sm:$0xff] %vm1657, %v1565
        %1660 = vst.msk [vmem:[%s385 + $0x10] sm:$0xff] %vm1657, %v1568
        %1661 = vst.msk [vmem:[%s385 + $0x18] sm:$0xff] %vm1657, %v1571
        %1662 = vst.msk [vmem:[%s385 + $0x20] sm:$0xff] %vm1657, %v1574
        %1663 = vst.msk [vmem:[%s385 + $0x28] sm:$0xff] %vm1657, %v1577
        %1664 = vst.msk [vmem:[%s385 + $0x30] sm:$0xff] %vm1657, %v1580
        %1665 = vst.msk [vmem:[%s385 + $0x38] sm:$0xff] %vm1657, %v1583
        %1666 = vst.msk [vmem:[%s385 + $0x40] sm:$0xff] %vm1657, %v1586
        %1667 = vst.msk [vmem:[%s385 + $0x48] sm:$0xff] %vm1657, %v1589
        %1668 = vst.msk [vmem:[%s385 + $0x50] sm:$0xff] %vm1657, %v1592
        %1669 = vst.msk [vmem:[%s385 + $0x58] sm:$0xff] %vm1657, %v1595
        %1670 = vst.msk [vmem:[%s385 + $0x60] sm:$0xff] %vm1657, %v1598
        %1671 = vst.msk [vmem:[%s385 + $0x68] sm:$0xff] %vm1657, %v1601
        %1672 = vst.msk [vmem:[%s385 + $0x70] sm:$0xff] %vm1657, %v1604
        %1673 = vst.msk [vmem:[%s385 + $0x78] sm:$0xff] %vm1657, %v1607
        %1674 = vst.msk [vmem:[%s385 + $0x80] sm:$0xff] %vm1657, %v1610
        %1675 = vst.msk [vmem:[%s385 + $0x88] sm:$0xff] %vm1657, %v1613
        %1676 = vst.msk [vmem:[%s385 + $0x90] sm:$0xff] %vm1657, %v1616
        %1677 = vst.msk [vmem:[%s385 + $0x98] sm:$0xff] %vm1657, %v1619
        %1678 = vst.msk [vmem:[%s385 + $0xa0] sm:$0xff] %vm1657, %v1622
        %1679 = vst.msk [vmem:[%s385 + $0xa8] sm:$0xff] %vm1657, %v1625
        %1680 = vst.msk [vmem:[%s385 + $0xb0] sm:$0xff] %vm1657, %v1628
        %1681 = vst.msk [vmem:[%s385 + $0xb8] sm:$0xff] %vm1657, %v1631
        %1682 = vst.msk [vmem:[%s385 + $0xc0] sm:$0xff] %vm1657, %v1634
        %1683 = vst.msk [vmem:[%s385 + $0xc8] sm:$0xff] %vm1657, %v1637
        %1684 = vst.msk [vmem:[%s385 + $0xd0] sm:$0xff] %vm1657, %v1640
        %1685 = vst.msk [vmem:[%s385 + $0xd8] sm:$0xff] %vm1657, %v1643
        %1686 = vst.msk [vmem:[%s385 + $0xe0] sm:$0xff] %vm1657, %v1646
        %1687 = vst.msk [vmem:[%s385 + $0xe8] sm:$0xff] %vm1657, %v1649
        %1688 = vst.msk [vmem:[%s385 + $0xf0] sm:$0xff] %vm1657, %v1652
        %1689 = vst.msk [vmem:[%s385 + $0xf8] sm:$0xff] %vm1657, %v1655
        %s1690 = sand.u32 %s191, 1
        %s1691 = scalar_lea.sflag [#allocation4], %s1690
        %s1692 = sand.u32 %s191, 1
        %s1693 = smul.addr %s1692, 256
        %s1694 = scalar_lea.vmem [#allocation13], %s1693
        // Predicated region
        $region69: #{forward.1} parent=43 // pred_check
          %p1695 = pneg %p201
        $region70: #{forward.1} parent=43 // pred_check_branch
          %1697 = sbr.rel (%p1695) target = $region72
        $region71: #{forward.1} parent=43 // pred_region
          %1699 = vsyncadd %s1691, 0
          %s1700 = smul.addr %s30, 32
          %s1701 = sadd.s32 %s31, %s1700
          %s1702 = smul.addr %s1701, 8
          %s1703 = scalar_lea.hbm %s6, %s1702
          %s1704 = sshll.u32 %s1694, 4
          %s1705 = int_to_ptr.vmem [resolvable:$true] %s1704
          %s1706 = sshll.u32 %s1703, 4
          %s1707 = int_to_ptr.hbm [resolvable:$true] %s1706
          %1712 = dma.vmem_to_hbm [thread:$0]  %s1705, 4096, %s1707, %s1691, 128, 128, 8
        $region72: #{forward.1} parent=43 // pred_fallthru
          _
      $region44: #{forward.1} parent=5 // pred_fallthru
        _
      %p1713 = scmp.le.s32.totalorder 2, %s21
      // Predicated region
      $region73: #{forward.1} parent=5 // pred_check
        %p1714 = pneg %p1713
      $region74: #{forward.1} parent=5 // pred_check_branch
        %1716 = sbr.rel (%p1714) target = $region76
      $region75: #{forward.1} parent=5 // pred_region
        %s1717 = ssub.s32 %s21, 2
        // Predicated region
        $region77: #{forward.1} parent=75 // pred_check
          %p1718 = pneg %p207
        $region78: #{forward.1} parent=75 // pred_check_branch
          %1720 = sbr.rel (%p1718) target = $region80
        $region79: #{forward.1} parent=75 // pred_region
          %s1721 = sand.u32 %s192, 1
          %s1722 = scalar_lea.sflag [#allocation4], %s1721
          %s1723 = sand.u32 %s192, 1
          %s1724 = smul.addr %s1723, 256
          %s1725 = scalar_lea.vmem [#allocation13], %s1724
          %1727 = dma.done %s1722, 4096
        $region80: #{forward.1} parent=75 // pred_fallthru
          _
      $region76: #{forward.1} parent=5 // pred_fallthru
        _
    $region6: #{forward.1} parent=1 // loop_footer
      %s25 = sadd.s32 1, %s21
    $region7: #{forward.1} parent=1 // loop_footer_branch
      %20 = sbr.rel target = $region3
    $region8: #{forward.1} parent=1 // loop_exit
      _
    %1728 = vsyncpa [#allocation3], 1
    %s1729 = scalar_lea.sflag [#allocation3], 1
    %1730 = vsyncpa %s1729, 1
    %1731 = vsyncpa [#allocation6], 1
    %1732 = vsyncpa [#allocation9], 1
    %1733 = vsyncpa [#allocation12], 1
    %1734 = vsyncpa [#allocation4], 1
    %s1735 = scalar_lea.sflag [#allocation4], 1
    %1736 = vsyncpa %s1735, 1

</llo_original>
